<compile_context>
chip_gen: v7x
topology: tpu7x:2x2x1
jax: 0.10.0
libtpu: 0.0.40
codegen_flags: <defaults>
</compile_context>

<pallas_src>
import jax
import jax.numpy as jnp
from jax.experimental import pallas as pl
from jax.experimental.pallas import tpu as pltpu


def _mul_conv1x1_kernel(x_ref, s_ref, w_ref, o_ref):
    # x_ref: [Cin, HW], s_ref: [1, Cin], w_ref: [Cout_tile, Cin], o_ref: [Cout_tile, HW]
    ws = w_ref[...] * s_ref[...]                 # fold per-channel scale into the weight tile (VPU)
    o_ref[...] = jnp.dot(                        # 1x1 conv == matmul (MXU), f32 accumulation
        ws, x_ref[...], preferred_element_type=jnp.float32
    ).astype(o_ref.dtype)


def _tensorcores_per_chip() -> int:
    """Best-effort TC-per-chip detection; safe fallback is 1 (correct everywhere)."""
    try:
        kind = jax.devices()[0].device_kind.lower()
    except Exception:
        return 1
    # v7x has 2 TensorCores per chip; v5e / v6e have 1.
    if ("v7" in kind) or ("7x" in kind):
        return 2
    return 1


def mul_conv1x1(x_nchw, scale_nc11, weight_oi11, *, use_bf16_operands: bool = False):
    """Fused (x * scale) followed by a 1x1 conv (no bias), NCHW in / NCHW out.

    x_nchw:      [N, Cin, H, W]   (N must be 1, matching the reference module)
    scale_nc11:  [N, Cin, 1, 1]
    weight_oi11: [Cout, Cin, 1, 1]
    returns:     [N, Cout, H, W]
    """
    N, Cin, H, W = x_nchw.shape
    Cout = weight_oi11.shape[0]
    assert N == 1, "wrapper assumes batch size 1 (matches the reference module)"
    HW = H * W
    out_dtype = x_nchw.dtype

    # All reshapes below are free views of contiguous memory (no transposes).
    x2d = x_nchw.reshape(Cin, HW)
    s2d = scale_nc11.reshape(1, Cin)
    w2d = weight_oi11.reshape(Cout, Cin)

    if use_bf16_operands:
        # Optional: halves the dominant weight DMA and cuts MXU passes. Off by
        # default because bf16 operands over a Cin=1632 reduction can exceed a
        # 1e-3 correctness tolerance (see perf-review correctness concern).
        x2d = x2d.astype(jnp.bfloat16)
        s2d = s2d.astype(jnp.bfloat16)
        w2d = w2d.astype(jnp.bfloat16)

    # Split Cout only when there are 2 TensorCores to feed (v7x). On 1-TC chips the
    # split costs extra grid-step overhead and (on v5e's 128x128 MXU) an extra,
    # nearly empty M-tile per step.
    n_cout_blocks = 1
    if _tensorcores_per_chip() >= 2 and Cout % 2 == 0 and (Cout // 2) % 8 == 0:
        n_cout_blocks = 2
    cout_tile = Cout // n_cout_blocks

    in_bytes = jnp.dtype(x2d.dtype).itemsize
    out_bytes = jnp.dtype(out_dtype).itemsize
    cost = pl.CostEstimate(
        flops=2 * HW * Cin * Cout + Cin * Cout,      # matmul + scale fold
        transcendentals=0,
        bytes_accessed=(Cin * HW + Cin + Cout * Cin) * in_bytes + Cout * HW * out_bytes,
    )

    out2d = pl.pallas_call(
        _mul_conv1x1_kernel,
        out_shape=jax.ShapeDtypeStruct((Cout, HW), out_dtype),
        grid=(n_cout_blocks,),
        in_specs=[
            # Constant block index across the grid -> single-buffered.
            pl.BlockSpec((Cin, HW), lambda i: (0, 0), pipeline_mode=pl.Buffered(1)),
            pl.BlockSpec((1, Cin), lambda i: (0, 0), pipeline_mode=pl.Buffered(1)),
            # Weight half streams per step (dominant DMA); default double-buffering.
            pl.BlockSpec((cout_tile, Cin), lambda i: (i, 0)),
        ],
        out_specs=pl.BlockSpec((cout_tile, HW), lambda i: (i, 0)),
        compiler_params=pltpu.CompilerParams(
            dimension_semantics=("parallel",),       # shard Cout halves across TCs on v7x
        ),
        cost_estimate=cost,
    )(x2d, s2d, w2d)

    # Free reshape back to NCHW.
    return out2d.reshape(N, Cout, H, W)


if __name__ == "__main__":
    # Shapes from the module's forward pass.
    N, Cin, H, W = 1, 1632, 7, 7
    Cout = 272

    key = jax.random.PRNGKey(0)
    k1, k2, k3 = jax.random.split(key, 3)

    x389 = jax.random.normal(k1, (N, Cin, H, W), dtype=jnp.float32)
    x394 = jax.random.normal(k2, (N, Cin, 1, 1), dtype=jnp.float32)
    # Deterministic Conv2d weight init (kaiming-uniform-like bound, bias=False).
    bound = 1.0 / (Cin ** 0.5)
    conv_w = jax.random.uniform(
        k3, (Cout, Cin, 1, 1), dtype=jnp.float32, minval=-bound, maxval=bound
    )

    fn = jax.jit(mul_conv1x1)
    out = fn(x389, x394, conv_w)
    jax.block_until_ready(out)

    # Reference check in plain JAX (same math: broadcast mul + 1x1 conv).
    ref = jnp.einsum(
        "nchw,oc->nohw", x389 * x394, conv_w.reshape(Cout, Cin)
    )
    assert out.shape == (N, Cout, H, W)
    assert jnp.allclose(out, ref, atol=1e-3, rtol=1e-3)

    print("KERNEL_OK")
</pallas_src>

<mosaic_0001>
module attributes {stable_mosaic.version = 11 : i64} {
  func.func @_mul_conv1x1_kernel(%arg0: i32, %arg1: memref<1632x49xf32, #tpu.memory_space<vmem>>, %arg2: memref<1x1632xf32, #tpu.memory_space<vmem>>, %arg3: memref<272x1632xf32, #tpu.memory_space<vmem>>, %arg4: memref<272x49xf32, #tpu.memory_space<vmem>>) attributes {dimension_semantics = [#tpu.dimension_semantics<parallel>], iteration_bounds = array<i64: 1>, scalar_prefetch = 0 : i64, scratch_operands = 0 : i64, tpu.core_type = #tpu.core_type<tc>, window_params = [{pipeline_mode = #tpu.pipeline_mode<synchronous>, transform_indices = @transform_0, window_bounds = array<i64: 1632, 49>}, {pipeline_mode = #tpu.pipeline_mode<synchronous>, transform_indices = @transform_1, window_bounds = array<i64: 1, 1632>}, {transform_indices = @transform_2, window_bounds = array<i64: 272, 1632>}, {transform_indices = @transform_3, window_bounds = array<i64: 272, 49>}]} {
    %c0 = arith.constant 0 : index
    %c0_0 = arith.constant 0 : index
    %0 = vector.load %arg3[%c0, %c0_0] : memref<272x1632xf32, #tpu.memory_space<vmem>>, vector<272x1632xf32>
    %c0_1 = arith.constant 0 : index
    %c0_2 = arith.constant 0 : index
    %1 = vector.load %arg2[%c0_1, %c0_2] : memref<1x1632xf32, #tpu.memory_space<vmem>>, vector<1x1632xf32>
    %2 = vector.broadcast %1 : vector<1x1632xf32> to vector<272x1632xf32>
    %3 = arith.mulf %0, %2 : vector<272x1632xf32>
    %c0_3 = arith.constant 0 : index
    %c0_4 = arith.constant 0 : index
    %4 = vector.load %arg1[%c0_3, %c0_4] : memref<1632x49xf32, #tpu.memory_space<vmem>>, vector<1632x49xf32>
    %cst = arith.constant dense<0.000000e+00> : vector<272x49xf32>
    %5 = tpu.matmul %3, %4, %cst {dimension_numbers = #tpu.dot_dimension_numbers<[1], [0], [0], [1], [0, 0, 1, 1], [], []>} : vector<272x1632xf32>, vector<1632x49xf32>, vector<272x49xf32> -> vector<272x49xf32>
    %c0_5 = arith.constant 0 : index
    %c0_6 = arith.constant 0 : index
    %6 = vector.load %arg4[%c0_5, %c0_6] : memref<272x49xf32, #tpu.memory_space<vmem>>, vector<272x49xf32>
    tpu.vector_store %arg4[%c0_5, %c0_6], %5 {strides = array<i32>} : memref<272x49xf32, #tpu.memory_space<vmem>>, vector<272x49xf32>,
    return
  }
  func.func @transform_0(%arg0: i32) -> (i32, i32) {
    %c0_i32 = arith.constant 0 : i32
    %c0_i32_0 = arith.constant 0 : i32
    %c0_i32_1 = arith.constant 0 : i32
    return %c0_i32, %c0_i32_0 : i32, i32
  }
  func.func @transform_1(%arg0: i32) -> (i32, i32) {
    %c0_i32 = arith.constant 0 : i32
    %c0_i32_0 = arith.constant 0 : i32
    %c0_i32_1 = arith.constant 0 : i32
    return %c0_i32, %c0_i32_0 : i32, i32
  }
  func.func @transform_2(%arg0: i32) -> (i32, i32) {
    %c0_i32 = arith.constant 0 : i32
    %c0_i32_0 = arith.constant 0 : i32
    return %arg0, %c0_i32 : i32, i32
  }
  func.func @transform_3(%arg0: i32) -> (i32, i32) {
    %c0_i32 = arith.constant 0 : i32
    %c0_i32_0 = arith.constant 0 : i32
    return %arg0, %c0_i32 : i32, i32
  }
}

</mosaic_0001>

<llo_original>
// kernel: mul_conv1x1.1
$region0: #{mul_conv1x1.1}
  #allocation0 [shape = 'u32[]', space=smem, size = 0x4, offset = 0x4, fixed_abs, tag = 'smem constant byte address 0x4 - core index']
  #allocation1 [shape = 'u32[144,128]{1,0:T(1,128)}', space=vmem, size = 0x12000, scoped, tag = 'internal scratch']
  %s0 = inlined_call_operand.vmem [shape: f32[1632,49], index: 0, kind: input, shape index: {}]
  %s1 = inlined_call_operand.vmem [shape: f32[1,1632], index: 1, kind: input, shape index: {}]
  %s2 = inlined_call_operand.vmem [shape: f32[272,1632], index: 2, kind: input, shape index: {}]
  %s3 = inlined_call_operand.vmem [shape: f32[272,49], index: 3, kind: output, shape index: {}]
  %s4 = sld [smem:[#allocation0]]
  $region22: #{mul_conv1x1.1} parent=0
    _
  %s6 = ssub.s32 1, %s4
  %s7 = scalar_select 0, %s6, %s4
  // Predicated region
  $region2: #{mul_conv1x1.1} parent=0 // pred_check
    _
  $region3: #{mul_conv1x1.1} parent=0 // pred_check_branch
    %9 = sbr.rel (0) target = $region5
  $region4: #{mul_conv1x1.1} parent=0 // pred_region
    _
  $region5: #{mul_conv1x1.1} parent=0 // pred_fallthru
    _
  // Predicated region
  $region6: #{mul_conv1x1.1} parent=0 // pred_check
    _
  $region7: #{mul_conv1x1.1} parent=0 // pred_check_branch
    %11 = sbr.rel (0) target = $region9
  $region8: #{mul_conv1x1.1} parent=0 // pred_region
    _
  $region9: #{mul_conv1x1.1} parent=0 // pred_fallthru
    _
  // Predicated region
  $region10: #{mul_conv1x1.1} parent=0 // pred_check
    _
  $region11: #{mul_conv1x1.1} parent=0 // pred_check_branch
    %13 = sbr.rel (0) target = $region13
  $region12: #{mul_conv1x1.1} parent=0 // pred_region
    _
  $region13: #{mul_conv1x1.1} parent=0 // pred_fallthru
    _
  %v14 = vld [vmem:[%s2] sm:$0xff]
  %v15 = vld [vmem:[%s2 + $0x8] sm:$0xff]
  %v16 = vld [vmem:[%s2 + $0x10] sm:$0xff]
  %v17 = vld [vmem:[%s2 + $0x18] sm:$0xff]
  %v18 = vld [vmem:[%s2 + $0x20] sm:$0xff]
  %v19 = vld [vmem:[%s2 + $0x28] sm:$0xff]
  %v20 = vld [vmem:[%s2 + $0x30] sm:$0xff]
  %v21 = vld [vmem:[%s2 + $0x38] sm:$0xff]
  %v22 = vld [vmem:[%s2 + $0x40] sm:$0xff]
  %v23 = vld [vmem:[%s2 + $0x48] sm:$0xff]
  %v24 = vld [vmem:[%s2 + $0x50] sm:$0xff]
  %v25 = vld [vmem:[%s2 + $0x58] sm:$0xff]
  %v26 = vld [vmem:[%s2 + $0x60] sm:$0xff]
  %v27 = vld [vmem:[%s2 + $0x68] sm:$0xff]
  %v28 = vld [vmem:[%s2 + $0x70] sm:$0xff]
  %v29 = vld [vmem:[%s2 + $0x78] sm:$0xff]
  %v30 = vld [vmem:[%s2 + $0x80] sm:$0xff]
  %v31 = vld [vmem:[%s2 + $0x88] sm:$0xff]
  %v32 = vld [vmem:[%s2 + $0x90] sm:$0xff]
  %v33 = vld [vmem:[%s2 + $0x98] sm:$0xff]
  %v34 = vld [vmem:[%s2 + $0xa0] sm:$0xff]
  %v35 = vld [vmem:[%s2 + $0xa8] sm:$0xff]
  %v36 = vld [vmem:[%s2 + $0xb0] sm:$0xff]
  %v37 = vld [vmem:[%s2 + $0xb8] sm:$0xff]
  %v38 = vld [vmem:[%s2 + $0xc0] sm:$0xff]
  %v39 = vld [vmem:[%s2 + $0xc8] sm:$0xff]
  %v40 = vld [vmem:[%s2 + $0xd0] sm:$0xff]
  %v41 = vld [vmem:[%s2 + $0xd8] sm:$0xff]
  %v42 = vld [vmem:[%s2 + $0xe0] sm:$0xff]
  %v43 = vld [vmem:[%s2 + $0xe8] sm:$0xff]
  %v44 = vld [vmem:[%s2 + $0xf0] sm:$0xff]
  %v45 = vld [vmem:[%s2 + $0xf8] sm:$0xff]
  %v46 = vld [vmem:[%s2 + $0x100] sm:$0xff]
  %v47 = vld [vmem:[%s2 + $0x108] sm:$0xff]
  %v48 = vld [vmem:[%s2 + $0x110] sm:$0xff]
  %v49 = vld [vmem:[%s2 + $0x118] sm:$0xff]
  %v50 = vld [vmem:[%s2 + $0x120] sm:$0xff]
  %v51 = vld [vmem:[%s2 + $0x128] sm:$0xff]
  %v52 = vld [vmem:[%s2 + $0x130] sm:$0xff]
  %v53 = vld [vmem:[%s2 + $0x138] sm:$0xff]
  %v54 = vld [vmem:[%s2 + $0x140] sm:$0xff]
  %v55 = vld [vmem:[%s2 + $0x148] sm:$0xff]
  %v56 = vld [vmem:[%s2 + $0x150] sm:$0xff]
  %v57 = vld [vmem:[%s2 + $0x158] sm:$0xff]
  %v58 = vld [vmem:[%s2 + $0x160] sm:$0xff]
  %v59 = vld [vmem:[%s2 + $0x168] sm:$0xff]
  %v60 = vld [vmem:[%s2 + $0x170] sm:$0xff]
  %v61 = vld [vmem:[%s2 + $0x178] sm:$0xff]
  %v62 = vld [vmem:[%s2 + $0x180] sm:$0xff]
  %v63 = vld [vmem:[%s2 + $0x188] sm:$0xff]
  %v64 = vld [vmem:[%s2 + $0x190] sm:$0xff]
  %v65 = vld [vmem:[%s2 + $0x198] sm:$0xff]
  %v66 = vld [vmem:[%s2 + $0x1a0] sm:$0xff]
  %v67 = vld [vmem:[%s2 + $0x1a8] sm:$0xff]
  %v68 = vld [vmem:[%s2 + $0x1b0] sm:$0xff]
  %v69 = vld [vmem:[%s2 + $0x1b8] sm:$0xff]
  %v70 = vld [vmem:[%s2 + $0x1c0] sm:$0xff]
  %v71 = vld [vmem:[%s2 + $0x1c8] sm:$0xff]
  %v72 = vld [vmem:[%s2 + $0x1d0] sm:$0xff]
  %v73 = vld [vmem:[%s2 + $0x1d8] sm:$0xff]
  %v74 = vld [vmem:[%s2 + $0x1e0] sm:$0xff]
  %v75 = vld [vmem:[%s2 + $0x1e8] sm:$0xff]
  %v76 = vld [vmem:[%s2 + $0x1f0] sm:$0xff]
  %v77 = vld [vmem:[%s2 + $0x1f8] sm:$0xff]
  %v78 = vld [vmem:[%s2 + $0x200] sm:$0xff]
  %v79 = vld [vmem:[%s2 + $0x208] sm:$0xff]
  %v80 = vld [vmem:[%s2 + $0x210] sm:$0xff]
  %v81 = vld [vmem:[%s2 + $0x218] sm:$0xff]
  %v82 = vld [vmem:[%s2 + $0x220] sm:$0xff]
  %v83 = vld [vmem:[%s2 + $0x228] sm:$0xff]
  %v84 = vld [vmem:[%s2 + $0x230] sm:$0xff]
  %v85 = vld [vmem:[%s2 + $0x238] sm:$0xff]
  %v86 = vld [vmem:[%s2 + $0x240] sm:$0xff]
  %v87 = vld [vmem:[%s2 + $0x248] sm:$0xff]
  %v88 = vld [vmem:[%s2 + $0x250] sm:$0xff]
  %v89 = vld [vmem:[%s2 + $0x258] sm:$0xff]
  %v90 = vld [vmem:[%s2 + $0x260] sm:$0xff]
  %v91 = vld [vmem:[%s2 + $0x268] sm:$0xff]
  %v92 = vld [vmem:[%s2 + $0x270] sm:$0xff]
  %v93 = vld [vmem:[%s2 + $0x278] sm:$0xff]
  %v94 = vld [vmem:[%s2 + $0x280] sm:$0xff]
  %v95 = vld [vmem:[%s2 + $0x288] sm:$0xff]
  %v96 = vld [vmem:[%s2 + $0x290] sm:$0xff]
  %v97 = vld [vmem:[%s2 + $0x298] sm:$0xff]
  %v98 = vld [vmem:[%s2 + $0x2a0] sm:$0xff]
  %v99 = vld [vmem:[%s2 + $0x2a8] sm:$0xff]
  %v100 = vld [vmem:[%s2 + $0x2b0] sm:$0xff]
  %v101 = vld [vmem:[%s2 + $0x2b8] sm:$0xff]
  %v102 = vld [vmem:[%s2 + $0x2c0] sm:$0xff]
  %v103 = vld [vmem:[%s2 + $0x2c8] sm:$0xff]
  %v104 = vld [vmem:[%s2 + $0x2d0] sm:$0xff]
  %v105 = vld [vmem:[%s2 + $0x2d8] sm:$0xff]
  %v106 = vld [vmem:[%s2 + $0x2e0] sm:$0xff]
  %v107 = vld [vmem:[%s2 + $0x2e8] sm:$0xff]
  %v108 = vld [vmem:[%s2 + $0x2f0] sm:$0xff]
  %v109 = vld [vmem:[%s2 + $0x2f8] sm:$0xff]
  %v110 = vld [vmem:[%s2 + $0x300] sm:$0xff]
  %v111 = vld [vmem:[%s2 + $0x308] sm:$0xff]
  %v112 = vld [vmem:[%s2 + $0x310] sm:$0xff]
  %v113 = vld [vmem:[%s2 + $0x318] sm:$0xff]
  %v114 = vld [vmem:[%s2 + $0x320] sm:$0xff]
  %v115 = vld [vmem:[%s2 + $0x328] sm:$0xff]
  %v116 = vld [vmem:[%s2 + $0x330] sm:$0xff]
  %v117 = vld [vmem:[%s2 + $0x338] sm:$0xff]
  %v118 = vld [vmem:[%s2 + $0x340] sm:$0xff]
  %v119 = vld [vmem:[%s2 + $0x348] sm:$0xff]
  %v120 = vld [vmem:[%s2 + $0x350] sm:$0xff]
  %v121 = vld [vmem:[%s2 + $0x358] sm:$0xff]
  %v122 = vld [vmem:[%s2 + $0x360] sm:$0xff]
  %v123 = vld [vmem:[%s2 + $0x368] sm:$0xff]
  %v124 = vld [vmem:[%s2 + $0x370] sm:$0xff]
  %v125 = vld [vmem:[%s2 + $0x378] sm:$0xff]
  %v126 = vld [vmem:[%s2 + $0x380] sm:$0xff]
  %v127 = vld [vmem:[%s2 + $0x388] sm:$0xff]
  %v128 = vld [vmem:[%s2 + $0x390] sm:$0xff]
  %v129 = vld [vmem:[%s2 + $0x398] sm:$0xff]
  %v130 = vld [vmem:[%s2 + $0x3a0] sm:$0xff]
  %v131 = vld [vmem:[%s2 + $0x3a8] sm:$0xff]
  %v132 = vld [vmem:[%s2 + $0x3b0] sm:$0xff]
  %v133 = vld [vmem:[%s2 + $0x3b8] sm:$0xff]
  %v134 = vld [vmem:[%s2 + $0x3c0] sm:$0xff]
  %v135 = vld [vmem:[%s2 + $0x3c8] sm:$0xff]
  %v136 = vld [vmem:[%s2 + $0x3d0] sm:$0xff]
  %v137 = vld [vmem:[%s2 + $0x3d8] sm:$0xff]
  %v138 = vld [vmem:[%s2 + $0x3e0] sm:$0xff]
  %v139 = vld [vmem:[%s2 + $0x3e8] sm:$0xff]
  %v140 = vld [vmem:[%s2 + $0x3f0] sm:$0xff]
  %v141 = vld [vmem:[%s2 + $0x3f8] sm:$0xff]
  %v142 = vld [vmem:[%s2 + $0x400] sm:$0xff]
  %v143 = vld [vmem:[%s2 + $0x408] sm:$0xff]
  %v144 = vld [vmem:[%s2 + $0x410] sm:$0xff]
  %v145 = vld [vmem:[%s2 + $0x418] sm:$0xff]
  %v146 = vld [vmem:[%s2 + $0x420] sm:$0xff]
  %v147 = vld [vmem:[%s2 + $0x428] sm:$0xff]
  %v148 = vld [vmem:[%s2 + $0x430] sm:$0xff]
  %v149 = vld [vmem:[%s2 + $0x438] sm:$0xff]
  %v150 = vld [vmem:[%s2 + $0x440] sm:$0xff]
  %v151 = vld [vmem:[%s2 + $0x448] sm:$0xff]
  %v152 = vld [vmem:[%s2 + $0x450] sm:$0xff]
  %v153 = vld [vmem:[%s2 + $0x458] sm:$0xff]
  %v154 = vld [vmem:[%s2 + $0x460] sm:$0xff]
  %v155 = vld [vmem:[%s2 + $0x468] sm:$0xff]
  %v156 = vld [vmem:[%s2 + $0x470] sm:$0xff]
  %v157 = vld [vmem:[%s2 + $0x478] sm:$0xff]
  %v158 = vld [vmem:[%s2 + $0x480] sm:$0xff]
  %v159 = vld [vmem:[%s2 + $0x488] sm:$0xff]
  %v160 = vld [vmem:[%s2 + $0x490] sm:$0xff]
  %v161 = vld [vmem:[%s2 + $0x498] sm:$0xff]
  %v162 = vld [vmem:[%s2 + $0x4a0] sm:$0xff]
  %v163 = vld [vmem:[%s2 + $0x4a8] sm:$0xff]
  %v164 = vld [vmem:[%s2 + $0x4b0] sm:$0xff]
  %v165 = vld [vmem:[%s2 + $0x4b8] sm:$0xff]
  %v166 = vld [vmem:[%s2 + $0x4c0] sm:$0xff]
  %v167 = vld [vmem:[%s2 + $0x4c8] sm:$0xff]
  %v168 = vld [vmem:[%s2 + $0x4d0] sm:$0xff]
  %v169 = vld [vmem:[%s2 + $0x4d8] sm:$0xff]
  %v170 = vld [vmem:[%s2 + $0x4e0] sm:$0xff]
  %v171 = vld [vmem:[%s2 + $0x4e8] sm:$0xff]
  %v172 = vld [vmem:[%s2 + $0x4f0] sm:$0xff]
  %v173 = vld [vmem:[%s2 + $0x4f8] sm:$0xff]
  %v174 = vld [vmem:[%s2 + $0x500] sm:$0xff]
  %v175 = vld [vmem:[%s2 + $0x508] sm:$0xff]
  %v176 = vld [vmem:[%s2 + $0x510] sm:$0xff]
  %v177 = vld [vmem:[%s2 + $0x518] sm:$0xff]
  %v178 = vld [vmem:[%s2 + $0x520] sm:$0xff]
  %v179 = vld [vmem:[%s2 + $0x528] sm:$0xff]
  %v180 = vld [vmem:[%s2 + $0x530] sm:$0xff]
  %v181 = vld [vmem:[%s2 + $0x538] sm:$0xff]
  %v182 = vld [vmem:[%s2 + $0x540] sm:$0xff]
  %v183 = vld [vmem:[%s2 + $0x548] sm:$0xff]
  %v184 = vld [vmem:[%s2 + $0x550] sm:$0xff]
  %v185 = vld [vmem:[%s2 + $0x558] sm:$0xff]
  %v186 = vld [vmem:[%s2 + $0x560] sm:$0xff]
  %v187 = vld [vmem:[%s2 + $0x568] sm:$0xff]
  %v188 = vld [vmem:[%s2 + $0x570] sm:$0xff]
  %v189 = vld [vmem:[%s2 + $0x578] sm:$0xff]
  %v190 = vld [vmem:[%s2 + $0x580] sm:$0xff]
  %v191 = vld [vmem:[%s2 + $0x588] sm:$0xff]
  %v192 = vld [vmem:[%s2 + $0x590] sm:$0xff]
  %v193 = vld [vmem:[%s2 + $0x598] sm:$0xff]
  %v194 = vld [vmem:[%s2 + $0x5a0] sm:$0xff]
  %v195 = vld [vmem:[%s2 + $0x5a8] sm:$0xff]
  %v196 = vld [vmem:[%s2 + $0x5b0] sm:$0xff]
  %v197 = vld [vmem:[%s2 + $0x5b8] sm:$0xff]
  %v198 = vld [vmem:[%s2 + $0x5c0] sm:$0xff]
  %v199 = vld [vmem:[%s2 + $0x5c8] sm:$0xff]
  %v200 = vld [vmem:[%s2 + $0x5d0] sm:$0xff]
  %v201 = vld [vmem:[%s2 + $0x5d8] sm:$0xff]
  %v202 = vld [vmem:[%s2 + $0x5e0] sm:$0xff]
  %v203 = vld [vmem:[%s2 + $0x5e8] sm:$0xff]
  %v204 = vld [vmem:[%s2 + $0x5f0] sm:$0xff]
  %v205 = vld [vmem:[%s2 + $0x5f8] sm:$0xff]
  %v206 = vld [vmem:[%s2 + $0x600] sm:$0xff]
  %v207 = vld [vmem:[%s2 + $0x608] sm:$0xff]
  %v208 = vld [vmem:[%s2 + $0x610] sm:$0xff]
  %v209 = vld [vmem:[%s2 + $0x618] sm:$0xff]
  %v210 = vld [vmem:[%s2 + $0x620] sm:$0xff]
  %v211 = vld [vmem:[%s2 + $0x628] sm:$0xff]
  %v212 = vld [vmem:[%s2 + $0x630] sm:$0xff]
  %v213 = vld [vmem:[%s2 + $0x638] sm:$0xff]
  %v214 = vld [vmem:[%s2 + $0x640] sm:$0xff]
  %v215 = vld [vmem:[%s2 + $0x648] sm:$0xff]
  %v216 = vld [vmem:[%s2 + $0x650] sm:$0xff]
  %v217 = vld [vmem:[%s2 + $0x658] sm:$0xff]
  %v218 = vld [vmem:[%s2 + $0x660] sm:$0xff]
  %v219 = vld [vmem:[%s2 + $0x668] sm:$0xff]
  %v220 = vld [vmem:[%s2 + $0x670] sm:$0xff]
  %v221 = vld [vmem:[%s2 + $0x678] sm:$0xff]
  %v222 = vld [vmem:[%s2 + $0x680] sm:$0xff]
  %v223 = vld [vmem:[%s2 + $0x688] sm:$0xff]
  %v224 = vld [vmem:[%s2 + $0x690] sm:$0xff]
  %v225 = vld [vmem:[%s2 + $0x698] sm:$0xff]
  %v226 = vld [vmem:[%s2 + $0x6a0] sm:$0xff]
  %v227 = vld [vmem:[%s2 + $0x6a8] sm:$0xff]
  %v228 = vld [vmem:[%s2 + $0x6b0] sm:$0xff]
  %v229 = vld [vmem:[%s2 + $0x6b8] sm:$0xff]
  %v230 = vld [vmem:[%s2 + $0x6c0] sm:$0xff]
  %v231 = vld [vmem:[%s2 + $0x6c8] sm:$0xff]
  %v232 = vld [vmem:[%s2 + $0x6d0] sm:$0xff]
  %v233 = vld [vmem:[%s2 + $0x6d8] sm:$0xff]
  %v234 = vld [vmem:[%s2 + $0x6e0] sm:$0xff]
  %v235 = vld [vmem:[%s2 + $0x6e8] sm:$0xff]
  %v236 = vld [vmem:[%s2 + $0x6f0] sm:$0xff]
  %v237 = vld [vmem:[%s2 + $0x6f8] sm:$0xff]
  %v238 = vld [vmem:[%s2 + $0x700] sm:$0xff]
  %v239 = vld [vmem:[%s2 + $0x708] sm:$0xff]
  %v240 = vld [vmem:[%s2 + $0x710] sm:$0xff]
  %v241 = vld [vmem:[%s2 + $0x718] sm:$0xff]
  %v242 = vld [vmem:[%s2 + $0x720] sm:$0xff]
  %v243 = vld [vmem:[%s2 + $0x728] sm:$0xff]
  %v244 = vld [vmem:[%s2 + $0x730] sm:$0xff]
  %v245 = vld [vmem:[%s2 + $0x738] sm:$0xff]
  %v246 = vld [vmem:[%s2 + $0x740] sm:$0xff]
  %v247 = vld [vmem:[%s2 + $0x748] sm:$0xff]
  %v248 = vld [vmem:[%s2 + $0x750] sm:$0xff]
  %v249 = vld [vmem:[%s2 + $0x758] sm:$0xff]
  %v250 = vld [vmem:[%s2 + $0x760] sm:$0xff]
  %v251 = vld [vmem:[%s2 + $0x768] sm:$0xff]
  %v252 = vld [vmem:[%s2 + $0x770] sm:$0xff]
  %v253 = vld [vmem:[%s2 + $0x778] sm:$0xff]
  %v254 = vld [vmem:[%s2 + $0x780] sm:$0xff]
  %v255 = vld [vmem:[%s2 + $0x788] sm:$0xff]
  %v256 = vld [vmem:[%s2 + $0x790] sm:$0xff]
  %v257 = vld [vmem:[%s2 + $0x798] sm:$0xff]
  %v258 = vld [vmem:[%s2 + $0x7a0] sm:$0xff]
  %v259 = vld [vmem:[%s2 + $0x7a8] sm:$0xff]
  %v260 = vld [vmem:[%s2 + $0x7b0] sm:$0xff]
  %v261 = vld [vmem:[%s2 + $0x7b8] sm:$0xff]
  %v262 = vld [vmem:[%s2 + $0x7c0] sm:$0xff]
  %v263 = vld [vmem:[%s2 + $0x7c8] sm:$0xff]
  %v264 = vld [vmem:[%s2 + $0x7d0] sm:$0xff]
  %v265 = vld [vmem:[%s2 + $0x7d8] sm:$0xff]
  %v266 = vld [vmem:[%s2 + $0x7e0] sm:$0xff]
  %v267 = vld [vmem:[%s2 + $0x7e8] sm:$0xff]
  %v268 = vld [vmem:[%s2 + $0x7f0] sm:$0xff]
  %v269 = vld [vmem:[%s2 + $0x7f8] sm:$0xff]
  %v270 = vld [vmem:[%s2 + $0x800] sm:$0xff]
  %v271 = vld [vmem:[%s2 + $0x808] sm:$0xff]
  %v272 = vld [vmem:[%s2 + $0x810] sm:$0xff]
  %v273 = vld [vmem:[%s2 + $0x818] sm:$0xff]
  %v274 = vld [vmem:[%s2 + $0x820] sm:$0xff]
  %v275 = vld [vmem:[%s2 + $0x828] sm:$0xff]
  %v276 = vld [vmem:[%s2 + $0x830] sm:$0xff]
  %v277 = vld [vmem:[%s2 + $0x838] sm:$0xff]
  %v278 = vld [vmem:[%s2 + $0x840] sm:$0xff]
  %v279 = vld [vmem:[%s2 + $0x848] sm:$0xff]
  %v280 = vld [vmem:[%s2 + $0x850] sm:$0xff]
  %v281 = vld [vmem:[%s2 + $0x858] sm:$0xff]
  %v282 = vld [vmem:[%s2 + $0x860] sm:$0xff]
  %v283 = vld [vmem:[%s2 + $0x868] sm:$0xff]
  %v284 = vld [vmem:[%s2 + $0x870] sm:$0xff]
  %v285 = vld [vmem:[%s2 + $0x878] sm:$0xff]
  %v286 = vld [vmem:[%s2 + $0x880] sm:$0xff]
  %v287 = vld [vmem:[%s2 + $0x888] sm:$0xff]
  %v288 = vld [vmem:[%s2 + $0x890] sm:$0xff]
  %v289 = vld [vmem:[%s2 + $0x898] sm:$0xff]
  %v290 = vld [vmem:[%s2 + $0x8a0] sm:$0xff]
  %v291 = vld [vmem:[%s2 + $0x8a8] sm:$0xff]
  %v292 = vld [vmem:[%s2 + $0x8b0] sm:$0xff]
  %v293 = vld [vmem:[%s2 + $0x8b8] sm:$0xff]
  %v294 = vld [vmem:[%s2 + $0x8c0] sm:$0xff]
  %v295 = vld [vmem:[%s2 + $0x8c8] sm:$0xff]
  %v296 = vld [vmem:[%s2 + $0x8d0] sm:$0xff]
  %v297 = vld [vmem:[%s2 + $0x8d8] sm:$0xff]
  %v298 = vld [vmem:[%s2 + $0x8e0] sm:$0xff]
  %v299 = vld [vmem:[%s2 + $0x8e8] sm:$0xff]
  %v300 = vld [vmem:[%s2 + $0x8f0] sm:$0xff]
  %v301 = vld [vmem:[%s2 + $0x8f8] sm:$0xff]
  %v302 = vld [vmem:[%s2 + $0x900] sm:$0xff]
  %v303 = vld [vmem:[%s2 + $0x908] sm:$0xff]
  %v304 = vld [vmem:[%s2 + $0x910] sm:$0xff]
  %v305 = vld [vmem:[%s2 + $0x918] sm:$0xff]
  %v306 = vld [vmem:[%s2 + $0x920] sm:$0xff]
  %v307 = vld [vmem:[%s2 + $0x928] sm:$0xff]
  %v308 = vld [vmem:[%s2 + $0x930] sm:$0xff]
  %v309 = vld [vmem:[%s2 + $0x938] sm:$0xff]
  %v310 = vld [vmem:[%s2 + $0x940] sm:$0xff]
  %v311 = vld [vmem:[%s2 + $0x948] sm:$0xff]
  %v312 = vld [vmem:[%s2 + $0x950] sm:$0xff]
  %v313 = vld [vmem:[%s2 + $0x958] sm:$0xff]
  %v314 = vld [vmem:[%s2 + $0x960] sm:$0xff]
  %v315 = vld [vmem:[%s2 + $0x968] sm:$0xff]
  %v316 = vld [vmem:[%s2 + $0x970] sm:$0xff]
  %v317 = vld [vmem:[%s2 + $0x978] sm:$0xff]
  %v318 = vld [vmem:[%s2 + $0x980] sm:$0xff]
  %v319 = vld [vmem:[%s2 + $0x988] sm:$0xff]
  %v320 = vld [vmem:[%s2 + $0x990] sm:$0xff]
  %v321 = vld [vmem:[%s2 + $0x998] sm:$0xff]
  %v322 = vld [vmem:[%s2 + $0x9a0] sm:$0xff]
  %v323 = vld [vmem:[%s2 + $0x9a8] sm:$0xff]
  %v324 = vld [vmem:[%s2 + $0x9b0] sm:$0xff]
  %v325 = vld [vmem:[%s2 + $0x9b8] sm:$0xff]
  %v326 = vld [vmem:[%s2 + $0x9c0] sm:$0xff]
  %v327 = vld [vmem:[%s2 + $0x9c8] sm:$0xff]
  %v328 = vld [vmem:[%s2 + $0x9d0] sm:$0xff]
  %v329 = vld [vmem:[%s2 + $0x9d8] sm:$0xff]
  %v330 = vld [vmem:[%s2 + $0x9e0] sm:$0xff]
  %v331 = vld [vmem:[%s2 + $0x9e8] sm:$0xff]
  %v332 = vld [vmem:[%s2 + $0x9f0] sm:$0xff]
  %v333 = vld [vmem:[%s2 + $0x9f8] sm:$0xff]
  %v334 = vld [vmem:[%s2 + $0xa00] sm:$0xff]
  %v335 = vld [vmem:[%s2 + $0xa08] sm:$0xff]
  %v336 = vld [vmem:[%s2 + $0xa10] sm:$0xff]
  %v337 = vld [vmem:[%s2 + $0xa18] sm:$0xff]
  %v338 = vld [vmem:[%s2 + $0xa20] sm:$0xff]
  %v339 = vld [vmem:[%s2 + $0xa28] sm:$0xff]
  %v340 = vld [vmem:[%s2 + $0xa30] sm:$0xff]
  %v341 = vld [vmem:[%s2 + $0xa38] sm:$0xff]
  %v342 = vld [vmem:[%s2 + $0xa40] sm:$0xff]
  %v343 = vld [vmem:[%s2 + $0xa48] sm:$0xff]
  %v344 = vld [vmem:[%s2 + $0xa50] sm:$0xff]
  %v345 = vld [vmem:[%s2 + $0xa58] sm:$0xff]
  %v346 = vld [vmem:[%s2 + $0xa60] sm:$0xff]
  %v347 = vld [vmem:[%s2 + $0xa68] sm:$0xff]
  %v348 = vld [vmem:[%s2 + $0xa70] sm:$0xff]
  %v349 = vld [vmem:[%s2 + $0xa78] sm:$0xff]
  %v350 = vld [vmem:[%s2 + $0xa80] sm:$0xff]
  %v351 = vld [vmem:[%s2 + $0xa88] sm:$0xff]
  %v352 = vld [vmem:[%s2 + $0xa90] sm:$0xff]
  %v353 = vld [vmem:[%s2 + $0xa98] sm:$0xff]
  %v354 = vld [vmem:[%s2 + $0xaa0] sm:$0xff]
  %v355 = vld [vmem:[%s2 + $0xaa8] sm:$0xff]
  %v356 = vld [vmem:[%s2 + $0xab0] sm:$0xff]
  %v357 = vld [vmem:[%s2 + $0xab8] sm:$0xff]
  %v358 = vld [vmem:[%s2 + $0xac0] sm:$0xff]
  %v359 = vld [vmem:[%s2 + $0xac8] sm:$0xff]
  %v360 = vld [vmem:[%s2 + $0xad0] sm:$0xff]
  %v361 = vld [vmem:[%s2 + $0xad8] sm:$0xff]
  %v362 = vld [vmem:[%s2 + $0xae0] sm:$0xff]
  %v363 = vld [vmem:[%s2 + $0xae8] sm:$0xff]
  %v364 = vld [vmem:[%s2 + $0xaf0] sm:$0xff]
  %v365 = vld [vmem:[%s2 + $0xaf8] sm:$0xff]
  %v366 = vld [vmem:[%s2 + $0xb00] sm:$0xff]
  %v367 = vld [vmem:[%s2 + $0xb08] sm:$0xff]
  %v368 = vld [vmem:[%s2 + $0xb10] sm:$0xff]
  %v369 = vld [vmem:[%s2 + $0xb18] sm:$0xff]
  %v370 = vld [vmem:[%s2 + $0xb20] sm:$0xff]
  %v371 = vld [vmem:[%s2 + $0xb28] sm:$0xff]
  %v372 = vld [vmem:[%s2 + $0xb30] sm:$0xff]
  %v373 = vld [vmem:[%s2 + $0xb38] sm:$0xff]
  %v374 = vld [vmem:[%s2 + $0xb40] sm:$0xff]
  %v375 = vld [vmem:[%s2 + $0xb48] sm:$0xff]
  %v376 = vld [vmem:[%s2 + $0xb50] sm:$0xff]
  %v377 = vld [vmem:[%s2 + $0xb58] sm:$0xff]
  %v378 = vld [vmem:[%s2 + $0xb60] sm:$0xff]
  %v379 = vld [vmem:[%s2 + $0xb68] sm:$0xff]
  %v380 = vld [vmem:[%s2 + $0xb70] sm:$0xff]
  %v381 = vld [vmem:[%s2 + $0xb78] sm:$0xff]
  %v382 = vld [vmem:[%s2 + $0xb80] sm:$0xff]
  %v383 = vld [vmem:[%s2 + $0xb88] sm:$0xff]
  %v384 = vld [vmem:[%s2 + $0xb90] sm:$0xff]
  %v385 = vld [vmem:[%s2 + $0xb98] sm:$0xff]
  %v386 = vld [vmem:[%s2 + $0xba0] sm:$0xff]
  %v387 = vld [vmem:[%s2 + $0xba8] sm:$0xff]
  %v388 = vld [vmem:[%s2 + $0xbb0] sm:$0xff]
  %v389 = vld [vmem:[%s2 + $0xbb8] sm:$0xff]
  %v390 = vld [vmem:[%s2 + $0xbc0] sm:$0xff]
  %v391 = vld [vmem:[%s2 + $0xbc8] sm:$0xff]
  %v392 = vld [vmem:[%s2 + $0xbd0] sm:$0xff]
  %v393 = vld [vmem:[%s2 + $0xbd8] sm:$0xff]
  %v394 = vld [vmem:[%s2 + $0xbe0] sm:$0xff]
  %v395 = vld [vmem:[%s2 + $0xbe8] sm:$0xff]
  %v396 = vld [vmem:[%s2 + $0xbf0] sm:$0xff]
  %v397 = vld [vmem:[%s2 + $0xbf8] sm:$0xff]
  %v398 = vld [vmem:[%s2 + $0xc00] sm:$0xff]
  %v399 = vld [vmem:[%s2 + $0xc08] sm:$0xff]
  %v400 = vld [vmem:[%s2 + $0xc10] sm:$0xff]
  %v401 = vld [vmem:[%s2 + $0xc18] sm:$0xff]
  %v402 = vld [vmem:[%s2 + $0xc20] sm:$0xff]
  %v403 = vld [vmem:[%s2 + $0xc28] sm:$0xff]
  %v404 = vld [vmem:[%s2 + $0xc30] sm:$0xff]
  %v405 = vld [vmem:[%s2 + $0xc38] sm:$0xff]
  %v406 = vld [vmem:[%s2 + $0xc40] sm:$0xff]
  %v407 = vld [vmem:[%s2 + $0xc48] sm:$0xff]
  %v408 = vld [vmem:[%s2 + $0xc50] sm:$0xff]
  %v409 = vld [vmem:[%s2 + $0xc58] sm:$0xff]
  %v410 = vld [vmem:[%s2 + $0xc60] sm:$0xff]
  %v411 = vld [vmem:[%s2 + $0xc68] sm:$0xff]
  %v412 = vld [vmem:[%s2 + $0xc70] sm:$0xff]
  %v413 = vld [vmem:[%s2 + $0xc78] sm:$0xff]
  %v414 = vld [vmem:[%s2 + $0xc80] sm:$0xff]
  %v415 = vld [vmem:[%s2 + $0xc88] sm:$0xff]
  %v416 = vld [vmem:[%s2 + $0xc90] sm:$0xff]
  %v417 = vld [vmem:[%s2 + $0xc98] sm:$0xff]
  %v418 = vld [vmem:[%s2 + $0xca0] sm:$0xff]
  %v419 = vld [vmem:[%s2 + $0xca8] sm:$0xff]
  %v420 = vld [vmem:[%s2 + $0xcb0] sm:$0xff]
  %v421 = vld [vmem:[%s2 + $0xcb8] sm:$0xff]
  %v422 = vld [vmem:[%s2 + $0xcc0] sm:$0xff]
  %v423 = vld [vmem:[%s2 + $0xcc8] sm:$0xff]
  %v424 = vld [vmem:[%s2 + $0xcd0] sm:$0xff]
  %v425 = vld [vmem:[%s2 + $0xcd8] sm:$0xff]
  %v426 = vld [vmem:[%s2 + $0xce0] sm:$0xff]
  %v427 = vld [vmem:[%s2 + $0xce8] sm:$0xff]
  %v428 = vld [vmem:[%s2 + $0xcf0] sm:$0xff]
  %v429 = vld [vmem:[%s2 + $0xcf8] sm:$0xff]
  %v430 = vld [vmem:[%s2 + $0xd00] sm:$0xff]
  %v431 = vld [vmem:[%s2 + $0xd08] sm:$0xff]
  %v432 = vld [vmem:[%s2 + $0xd10] sm:$0xff]
  %v433 = vld [vmem:[%s2 + $0xd18] sm:$0xff]
  %v434 = vld [vmem:[%s2 + $0xd20] sm:$0xff]
  %v435 = vld [vmem:[%s2 + $0xd28] sm:$0xff]
  %v436 = vld [vmem:[%s2 + $0xd30] sm:$0xff]
  %v437 = vld [vmem:[%s2 + $0xd38] sm:$0xff]
  %v438 = vld [vmem:[%s2 + $0xd40] sm:$0xff]
  %v439 = vld [vmem:[%s2 + $0xd48] sm:$0xff]
  %v440 = vld [vmem:[%s2 + $0xd50] sm:$0xff]
  %v441 = vld [vmem:[%s2 + $0xd58] sm:$0xff]
  %v442 = vld [vmem:[%s2 + $0xd60] sm:$0xff]
  %v443 = vld [vmem:[%s2 + $0xd68] sm:$0xff]
  %v444 = vld [vmem:[%s2 + $0xd70] sm:$0xff]
  %v445 = vld [vmem:[%s2 + $0xd78] sm:$0xff]
  %v446 = vld [vmem:[%s2 + $0xd80] sm:$0xff]
  %v447 = vld [vmem:[%s2 + $0xd88] sm:$0xff]
  %v448 = vld [vmem:[%s2 + $0xd90] sm:$0xff]
  %v449 = vld [vmem:[%s2 + $0xd98] sm:$0xff]
  %v450 = vld [vmem:[%s2 + $0xda0] sm:$0xff]
  %v451 = vld [vmem:[%s2 + $0xda8] sm:$0xff]
  %v452 = vld [vmem:[%s2 + $0xdb0] sm:$0xff]
  %v453 = vld [vmem:[%s2 + $0xdb8] sm:$0xff]
  %v454 = vld [vmem:[%s2 + $0xdc0] sm:$0xff]
  %v455 = vld [vmem:[%s2 + $0xdc8] sm:$0xff]
  %v456 = vld [vmem:[%s1] sm:$0xff]
  %v457 = vld [vmem:[%s1 + $0x8] sm:$0x1f]
  %v460 = vlaneseq
  %v461 = vshrl.u32 %v460, 7
  %v462 = vsub.s32 0, %v461
  %v463 = vrot.slane %v456, %v462
  %v464 = vlaneseq
  %v465 = vshrl.u32 %v464, 7
  %v466 = vsub.s32 1, %v465
  %v467 = vrot.slane %v456, %v466
  %v468 = vlaneseq
  %v469 = vshrl.u32 %v468, 7
  %v470 = vsub.s32 2, %v469
  %v471 = vrot.slane %v456, %v470
  %v472 = vlaneseq
  %v473 = vshrl.u32 %v472, 7
  %v474 = vsub.s32 3, %v473
  %v475 = vrot.slane %v456, %v474
  %v476 = vlaneseq
  %v477 = vshrl.u32 %v476, 7
  %v478 = vsub.s32 4, %v477
  %v479 = vrot.slane %v456, %v478
  %v480 = vlaneseq
  %v481 = vshrl.u32 %v480, 7
  %v482 = vsub.s32 5, %v481
  %v483 = vrot.slane %v456, %v482
  %v484 = vlaneseq
  %v485 = vshrl.u32 %v484, 7
  %v486 = vsub.s32 6, %v485
  %v487 = vrot.slane %v456, %v486
  %v488 = vlaneseq
  %v489 = vshrl.u32 %v488, 7
  %v490 = vsub.s32 7, %v489
  %v491 = vrot.slane %v456, %v490
  %v492 = vlaneseq
  %v493 = vshrl.u32 %v492, 7
  %v494 = vsub.s32 0, %v493
  %v495 = vrot.slane %v457, %v494
  %v496 = vlaneseq
  %v497 = vshrl.u32 %v496, 7
  %v498 = vsub.s32 1, %v497
  %v499 = vrot.slane %v457, %v498
  %v500 = vlaneseq
  %v501 = vshrl.u32 %v500, 7
  %v502 = vsub.s32 2, %v501
  %v503 = vrot.slane %v457, %v502
  %v504 = vlaneseq
  %v505 = vshrl.u32 %v504, 7
  %v506 = vsub.s32 3, %v505
  %v507 = vrot.slane %v457, %v506
  %v508 = vlaneseq
  %v509 = vshrl.u32 %v508, 7
  %v510 = vsub.s32 4, %v509
  %v511 = vrot.slane %v457, %v510
  %v525 = vmul.f32 %v14, %v463
  %v526 = vmul.f32 %v15, %v467
  %v527 = vmul.f32 %v16, %v471
  %v528 = vmul.f32 %v17, %v475
  %v529 = vmul.f32 %v18, %v479
  %v530 = vmul.f32 %v19, %v483
  %v531 = vmul.f32 %v20, %v487
  %v532 = vmul.f32 %v21, %v491
  %v533 = vmul.f32 %v22, %v495
  %v534 = vmul.f32 %v23, %v499
  %v535 = vmul.f32 %v24, %v503
  %v536 = vmul.f32 %v25, %v507
  %v537 = vmul.f32 %v26, %v511
  %v538 = vmul.f32 %v27, %v463
  %v539 = vmul.f32 %v28, %v467
  %v540 = vmul.f32 %v29, %v471
  %v541 = vmul.f32 %v30, %v475
  %v542 = vmul.f32 %v31, %v479
  %v543 = vmul.f32 %v32, %v483
  %v544 = vmul.f32 %v33, %v487
  %v545 = vmul.f32 %v34, %v491
  %v546 = vmul.f32 %v35, %v495
  %v547 = vmul.f32 %v36, %v499
  %v548 = vmul.f32 %v37, %v503
  %v549 = vmul.f32 %v38, %v507
  %v550 = vmul.f32 %v39, %v511
  %v551 = vmul.f32 %v40, %v463
  %v552 = vmul.f32 %v41, %v467
  %v553 = vmul.f32 %v42, %v471
  %v554 = vmul.f32 %v43, %v475
  %v555 = vmul.f32 %v44, %v479
  %v556 = vmul.f32 %v45, %v483
  %v557 = vmul.f32 %v46, %v487
  %v558 = vmul.f32 %v47, %v491
  %v559 = vmul.f32 %v48, %v495
  %v560 = vmul.f32 %v49, %v499
  %v561 = vmul.f32 %v50, %v503
  %v562 = vmul.f32 %v51, %v507
  %v563 = vmul.f32 %v52, %v511
  %v564 = vmul.f32 %v53, %v463
  %v565 = vmul.f32 %v54, %v467
  %v566 = vmul.f32 %v55, %v471
  %v567 = vmul.f32 %v56, %v475
  %v568 = vmul.f32 %v57, %v479
  %v569 = vmul.f32 %v58, %v483
  %v570 = vmul.f32 %v59, %v487
  %v571 = vmul.f32 %v60, %v491
  %v572 = vmul.f32 %v61, %v495
  %v573 = vmul.f32 %v62, %v499
  %v574 = vmul.f32 %v63, %v503
  %v575 = vmul.f32 %v64, %v507
  %v576 = vmul.f32 %v65, %v511
  %v577 = vmul.f32 %v66, %v463
  %v578 = vmul.f32 %v67, %v467
  %v579 = vmul.f32 %v68, %v471
  %v580 = vmul.f32 %v69, %v475
  %v581 = vmul.f32 %v70, %v479
  %v582 = vmul.f32 %v71, %v483
  %v583 = vmul.f32 %v72, %v487
  %v584 = vmul.f32 %v73, %v491
  %v585 = vmul.f32 %v74, %v495
  %v586 = vmul.f32 %v75, %v499
  %v587 = vmul.f32 %v76, %v503
  %v588 = vmul.f32 %v77, %v507
  %v589 = vmul.f32 %v78, %v511
  %v590 = vmul.f32 %v79, %v463
  %v591 = vmul.f32 %v80, %v467
  %v592 = vmul.f32 %v81, %v471
  %v593 = vmul.f32 %v82, %v475
  %v594 = vmul.f32 %v83, %v479
  %v595 = vmul.f32 %v84, %v483
  %v596 = vmul.f32 %v85, %v487
  %v597 = vmul.f32 %v86, %v491
  %v598 = vmul.f32 %v87, %v495
  %v599 = vmul.f32 %v88, %v499
  %v600 = vmul.f32 %v89, %v503
  %v601 = vmul.f32 %v90, %v507
  %v602 = vmul.f32 %v91, %v511
  %v603 = vmul.f32 %v92, %v463
  %v604 = vmul.f32 %v93, %v467
  %v605 = vmul.f32 %v94, %v471
  %v606 = vmul.f32 %v95, %v475
  %v607 = vmul.f32 %v96, %v479
  %v608 = vmul.f32 %v97, %v483
  %v609 = vmul.f32 %v98, %v487
  %v610 = vmul.f32 %v99, %v491
  %v611 = vmul.f32 %v100, %v495
  %v612 = vmul.f32 %v101, %v499
  %v613 = vmul.f32 %v102, %v503
  %v614 = vmul.f32 %v103, %v507
  %v615 = vmul.f32 %v104, %v511
  %v616 = vmul.f32 %v105, %v463
  %v617 = vmul.f32 %v106, %v467
  %v618 = vmul.f32 %v107, %v471
  %v619 = vmul.f32 %v108, %v475
  %v620 = vmul.f32 %v109, %v479
  %v621 = vmul.f32 %v110, %v483
  %v622 = vmul.f32 %v111, %v487
  %v623 = vmul.f32 %v112, %v491
  %v624 = vmul.f32 %v113, %v495
  %v625 = vmul.f32 %v114, %v499
  %v626 = vmul.f32 %v115, %v503
  %v627 = vmul.f32 %v116, %v507
  %v628 = vmul.f32 %v117, %v511
  %v629 = vmul.f32 %v118, %v463
  %v630 = vmul.f32 %v119, %v467
  %v631 = vmul.f32 %v120, %v471
  %v632 = vmul.f32 %v121, %v475
  %v633 = vmul.f32 %v122, %v479
  %v634 = vmul.f32 %v123, %v483
  %v635 = vmul.f32 %v124, %v487
  %v636 = vmul.f32 %v125, %v491
  %v637 = vmul.f32 %v126, %v495
  %v638 = vmul.f32 %v127, %v499
  %v639 = vmul.f32 %v128, %v503
  %v640 = vmul.f32 %v129, %v507
  %v641 = vmul.f32 %v130, %v511
  %v642 = vmul.f32 %v131, %v463
  %v643 = vmul.f32 %v132, %v467
  %v644 = vmul.f32 %v133, %v471
  %v645 = vmul.f32 %v134, %v475
  %v646 = vmul.f32 %v135, %v479
  %v647 = vmul.f32 %v136, %v483
  %v648 = vmul.f32 %v137, %v487
  %v649 = vmul.f32 %v138, %v491
  %v650 = vmul.f32 %v139, %v495
  %v651 = vmul.f32 %v140, %v499
  %v652 = vmul.f32 %v141, %v503
  %v653 = vmul.f32 %v142, %v507
  %v654 = vmul.f32 %v143, %v511
  %v655 = vmul.f32 %v144, %v463
  %v656 = vmul.f32 %v145, %v467
  %v657 = vmul.f32 %v146, %v471
  %v658 = vmul.f32 %v147, %v475
  %v659 = vmul.f32 %v148, %v479
  %v660 = vmul.f32 %v149, %v483
  %v661 = vmul.f32 %v150, %v487
  %v662 = vmul.f32 %v151, %v491
  %v663 = vmul.f32 %v152, %v495
  %v664 = vmul.f32 %v153, %v499
  %v665 = vmul.f32 %v154, %v503
  %v666 = vmul.f32 %v155, %v507
  %v667 = vmul.f32 %v156, %v511
  %v668 = vmul.f32 %v157, %v463
  %v669 = vmul.f32 %v158, %v467
  %v670 = vmul.f32 %v159, %v471
  %v671 = vmul.f32 %v160, %v475
  %v672 = vmul.f32 %v161, %v479
  %v673 = vmul.f32 %v162, %v483
  %v674 = vmul.f32 %v163, %v487
  %v675 = vmul.f32 %v164, %v491
  %v676 = vmul.f32 %v165, %v495
  %v677 = vmul.f32 %v166, %v499
  %v678 = vmul.f32 %v167, %v503
  %v679 = vmul.f32 %v168, %v507
  %v680 = vmul.f32 %v169, %v511
  %v681 = vmul.f32 %v170, %v463
  %v682 = vmul.f32 %v171, %v467
  %v683 = vmul.f32 %v172, %v471
  %v684 = vmul.f32 %v173, %v475
  %v685 = vmul.f32 %v174, %v479
  %v686 = vmul.f32 %v175, %v483
  %v687 = vmul.f32 %v176, %v487
  %v688 = vmul.f32 %v177, %v491
  %v689 = vmul.f32 %v178, %v495
  %v690 = vmul.f32 %v179, %v499
  %v691 = vmul.f32 %v180, %v503
  %v692 = vmul.f32 %v181, %v507
  %v693 = vmul.f32 %v182, %v511
  %v694 = vmul.f32 %v183, %v463
  %v695 = vmul.f32 %v184, %v467
  %v696 = vmul.f32 %v185, %v471
  %v697 = vmul.f32 %v186, %v475
  %v698 = vmul.f32 %v187, %v479
  %v699 = vmul.f32 %v188, %v483
  %v700 = vmul.f32 %v189, %v487
  %v701 = vmul.f32 %v190, %v491
  %v702 = vmul.f32 %v191, %v495
  %v703 = vmul.f32 %v192, %v499
  %v704 = vmul.f32 %v193, %v503
  %v705 = vmul.f32 %v194, %v507
  %v706 = vmul.f32 %v195, %v511
  %v707 = vmul.f32 %v196, %v463
  %v708 = vmul.f32 %v197, %v467
  %v709 = vmul.f32 %v198, %v471
  %v710 = vmul.f32 %v199, %v475
  %v711 = vmul.f32 %v200, %v479
  %v712 = vmul.f32 %v201, %v483
  %v713 = vmul.f32 %v202, %v487
  %v714 = vmul.f32 %v203, %v491
  %v715 = vmul.f32 %v204, %v495
  %v716 = vmul.f32 %v205, %v499
  %v717 = vmul.f32 %v206, %v503
  %v718 = vmul.f32 %v207, %v507
  %v719 = vmul.f32 %v208, %v511
  %v720 = vmul.f32 %v209, %v463
  %v721 = vmul.f32 %v210, %v467
  %v722 = vmul.f32 %v211, %v471
  %v723 = vmul.f32 %v212, %v475
  %v724 = vmul.f32 %v213, %v479
  %v725 = vmul.f32 %v214, %v483
  %v726 = vmul.f32 %v215, %v487
  %v727 = vmul.f32 %v216, %v491
  %v728 = vmul.f32 %v217, %v495
  %v729 = vmul.f32 %v218, %v499
  %v730 = vmul.f32 %v219, %v503
  %v731 = vmul.f32 %v220, %v507
  %v732 = vmul.f32 %v221, %v511
  %v733 = vmul.f32 %v222, %v463
  %v734 = vmul.f32 %v223, %v467
  %v735 = vmul.f32 %v224, %v471
  %v736 = vmul.f32 %v225, %v475
  %v737 = vmul.f32 %v226, %v479
  %v738 = vmul.f32 %v227, %v483
  %v739 = vmul.f32 %v228, %v487
  %v740 = vmul.f32 %v229, %v491
  %v741 = vmul.f32 %v230, %v495
  %v742 = vmul.f32 %v231, %v499
  %v743 = vmul.f32 %v232, %v503
  %v744 = vmul.f32 %v233, %v507
  %v745 = vmul.f32 %v234, %v511
  %v746 = vmul.f32 %v235, %v463
  %v747 = vmul.f32 %v236, %v467
  %v748 = vmul.f32 %v237, %v471
  %v749 = vmul.f32 %v238, %v475
  %v750 = vmul.f32 %v239, %v479
  %v751 = vmul.f32 %v240, %v483
  %v752 = vmul.f32 %v241, %v487
  %v753 = vmul.f32 %v242, %v491
  %v754 = vmul.f32 %v243, %v495
  %v755 = vmul.f32 %v244, %v499
  %v756 = vmul.f32 %v245, %v503
  %v757 = vmul.f32 %v246, %v507
  %v758 = vmul.f32 %v247, %v511
  %v759 = vmul.f32 %v248, %v463
  %v760 = vmul.f32 %v249, %v467
  %v761 = vmul.f32 %v250, %v471
  %v762 = vmul.f32 %v251, %v475
  %v763 = vmul.f32 %v252, %v479
  %v764 = vmul.f32 %v253, %v483
  %v765 = vmul.f32 %v254, %v487
  %v766 = vmul.f32 %v255, %v491
  %v767 = vmul.f32 %v256, %v495
  %v768 = vmul.f32 %v257, %v499
  %v769 = vmul.f32 %v258, %v503
  %v770 = vmul.f32 %v259, %v507
  %v771 = vmul.f32 %v260, %v511
  %v772 = vmul.f32 %v261, %v463
  %v773 = vmul.f32 %v262, %v467
  %v774 = vmul.f32 %v263, %v471
  %v775 = vmul.f32 %v264, %v475
  %v776 = vmul.f32 %v265, %v479
  %v777 = vmul.f32 %v266, %v483
  %v778 = vmul.f32 %v267, %v487
  %v779 = vmul.f32 %v268, %v491
  %v780 = vmul.f32 %v269, %v495
  %v781 = vmul.f32 %v270, %v499
  %v782 = vmul.f32 %v271, %v503
  %v783 = vmul.f32 %v272, %v507
  %v784 = vmul.f32 %v273, %v511
  %v785 = vmul.f32 %v274, %v463
  %v786 = vmul.f32 %v275, %v467
  %v787 = vmul.f32 %v276, %v471
  %v788 = vmul.f32 %v277, %v475
  %v789 = vmul.f32 %v278, %v479
  %v790 = vmul.f32 %v279, %v483
  %v791 = vmul.f32 %v280, %v487
  %v792 = vmul.f32 %v281, %v491
  %v793 = vmul.f32 %v282, %v495
  %v794 = vmul.f32 %v283, %v499
  %v795 = vmul.f32 %v284, %v503
  %v796 = vmul.f32 %v285, %v507
  %v797 = vmul.f32 %v286, %v511
  %v798 = vmul.f32 %v287, %v463
  %v799 = vmul.f32 %v288, %v467
  %v800 = vmul.f32 %v289, %v471
  %v801 = vmul.f32 %v290, %v475
  %v802 = vmul.f32 %v291, %v479
  %v803 = vmul.f32 %v292, %v483
  %v804 = vmul.f32 %v293, %v487
  %v805 = vmul.f32 %v294, %v491
  %v806 = vmul.f32 %v295, %v495
  %v807 = vmul.f32 %v296, %v499
  %v808 = vmul.f32 %v297, %v503
  %v809 = vmul.f32 %v298, %v507
  %v810 = vmul.f32 %v299, %v511
  %v811 = vmul.f32 %v300, %v463
  %v812 = vmul.f32 %v301, %v467
  %v813 = vmul.f32 %v302, %v471
  %v814 = vmul.f32 %v303, %v475
  %v815 = vmul.f32 %v304, %v479
  %v816 = vmul.f32 %v305, %v483
  %v817 = vmul.f32 %v306, %v487
  %v818 = vmul.f32 %v307, %v491
  %v819 = vmul.f32 %v308, %v495
  %v820 = vmul.f32 %v309, %v499
  %v821 = vmul.f32 %v310, %v503
  %v822 = vmul.f32 %v311, %v507
  %v823 = vmul.f32 %v312, %v511
  %v824 = vmul.f32 %v313, %v463
  %v825 = vmul.f32 %v314, %v467
  %v826 = vmul.f32 %v315, %v471
  %v827 = vmul.f32 %v316, %v475
  %v828 = vmul.f32 %v317, %v479
  %v829 = vmul.f32 %v318, %v483
  %v830 = vmul.f32 %v319, %v487
  %v831 = vmul.f32 %v320, %v491
  %v832 = vmul.f32 %v321, %v495
  %v833 = vmul.f32 %v322, %v499
  %v834 = vmul.f32 %v323, %v503
  %v835 = vmul.f32 %v324, %v507
  %v836 = vmul.f32 %v325, %v511
  %v837 = vmul.f32 %v326, %v463
  %v838 = vmul.f32 %v327, %v467
  %v839 = vmul.f32 %v328, %v471
  %v840 = vmul.f32 %v329, %v475
  %v841 = vmul.f32 %v330, %v479
  %v842 = vmul.f32 %v331, %v483
  %v843 = vmul.f32 %v332, %v487
  %v844 = vmul.f32 %v333, %v491
  %v845 = vmul.f32 %v334, %v495
  %v846 = vmul.f32 %v335, %v499
  %v847 = vmul.f32 %v336, %v503
  %v848 = vmul.f32 %v337, %v507
  %v849 = vmul.f32 %v338, %v511
  %v850 = vmul.f32 %v339, %v463
  %v851 = vmul.f32 %v340, %v467
  %v852 = vmul.f32 %v341, %v471
  %v853 = vmul.f32 %v342, %v475
  %v854 = vmul.f32 %v343, %v479
  %v855 = vmul.f32 %v344, %v483
  %v856 = vmul.f32 %v345, %v487
  %v857 = vmul.f32 %v346, %v491
  %v858 = vmul.f32 %v347, %v495
  %v859 = vmul.f32 %v348, %v499
  %v860 = vmul.f32 %v349, %v503
  %v861 = vmul.f32 %v350, %v507
  %v862 = vmul.f32 %v351, %v511
  %v863 = vmul.f32 %v352, %v463
  %v864 = vmul.f32 %v353, %v467
  %v865 = vmul.f32 %v354, %v471
  %v866 = vmul.f32 %v355, %v475
  %v867 = vmul.f32 %v356, %v479
  %v868 = vmul.f32 %v357, %v483
  %v869 = vmul.f32 %v358, %v487
  %v870 = vmul.f32 %v359, %v491
  %v871 = vmul.f32 %v360, %v495
  %v872 = vmul.f32 %v361, %v499
  %v873 = vmul.f32 %v362, %v503
  %v874 = vmul.f32 %v363, %v507
  %v875 = vmul.f32 %v364, %v511
  %v876 = vmul.f32 %v365, %v463
  %v877 = vmul.f32 %v366, %v467
  %v878 = vmul.f32 %v367, %v471
  %v879 = vmul.f32 %v368, %v475
  %v880 = vmul.f32 %v369, %v479
  %v881 = vmul.f32 %v370, %v483
  %v882 = vmul.f32 %v371, %v487
  %v883 = vmul.f32 %v372, %v491
  %v884 = vmul.f32 %v373, %v495
  %v885 = vmul.f32 %v374, %v499
  %v886 = vmul.f32 %v375, %v503
  %v887 = vmul.f32 %v376, %v507
  %v888 = vmul.f32 %v377, %v511
  %v889 = vmul.f32 %v378, %v463
  %v890 = vmul.f32 %v379, %v467
  %v891 = vmul.f32 %v380, %v471
  %v892 = vmul.f32 %v381, %v475
  %v893 = vmul.f32 %v382, %v479
  %v894 = vmul.f32 %v383, %v483
  %v895 = vmul.f32 %v384, %v487
  %v896 = vmul.f32 %v385, %v491
  %v897 = vmul.f32 %v386, %v495
  %v898 = vmul.f32 %v387, %v499
  %v899 = vmul.f32 %v388, %v503
  %v900 = vmul.f32 %v389, %v507
  %v901 = vmul.f32 %v390, %v511
  %v902 = vmul.f32 %v391, %v463
  %v903 = vmul.f32 %v392, %v467
  %v904 = vmul.f32 %v393, %v471
  %v905 = vmul.f32 %v394, %v475
  %v906 = vmul.f32 %v395, %v479
  %v907 = vmul.f32 %v396, %v483
  %v908 = vmul.f32 %v397, %v487
  %v909 = vmul.f32 %v398, %v491
  %v910 = vmul.f32 %v399, %v495
  %v911 = vmul.f32 %v400, %v499
  %v912 = vmul.f32 %v401, %v503
  %v913 = vmul.f32 %v402, %v507
  %v914 = vmul.f32 %v403, %v511
  %v915 = vmul.f32 %v404, %v463
  %v916 = vmul.f32 %v405, %v467
  %v917 = vmul.f32 %v406, %v471
  %v918 = vmul.f32 %v407, %v475
  %v919 = vmul.f32 %v408, %v479
  %v920 = vmul.f32 %v409, %v483
  %v921 = vmul.f32 %v410, %v487
  %v922 = vmul.f32 %v411, %v491
  %v923 = vmul.f32 %v412, %v495
  %v924 = vmul.f32 %v413, %v499
  %v925 = vmul.f32 %v414, %v503
  %v926 = vmul.f32 %v415, %v507
  %v927 = vmul.f32 %v416, %v511
  %v928 = vmul.f32 %v417, %v463
  %v929 = vmul.f32 %v418, %v467
  %v930 = vmul.f32 %v419, %v471
  %v931 = vmul.f32 %v420, %v475
  %v932 = vmul.f32 %v421, %v479
  %v933 = vmul.f32 %v422, %v483
  %v934 = vmul.f32 %v423, %v487
  %v935 = vmul.f32 %v424, %v491
  %v936 = vmul.f32 %v425, %v495
  %v937 = vmul.f32 %v426, %v499
  %v938 = vmul.f32 %v427, %v503
  %v939 = vmul.f32 %v428, %v507
  %v940 = vmul.f32 %v429, %v511
  %v941 = vmul.f32 %v430, %v463
  %v942 = vmul.f32 %v431, %v467
  %v943 = vmul.f32 %v432, %v471
  %v944 = vmul.f32 %v433, %v475
  %v945 = vmul.f32 %v434, %v479
  %v946 = vmul.f32 %v435, %v483
  %v947 = vmul.f32 %v436, %v487
  %v948 = vmul.f32 %v437, %v491
  %v949 = vmul.f32 %v438, %v495
  %v950 = vmul.f32 %v439, %v499
  %v951 = vmul.f32 %v440, %v503
  %v952 = vmul.f32 %v441, %v507
  %v953 = vmul.f32 %v442, %v511
  %v954 = vmul.f32 %v443, %v463
  %v955 = vmul.f32 %v444, %v467
  %v956 = vmul.f32 %v445, %v471
  %v957 = vmul.f32 %v446, %v475
  %v958 = vmul.f32 %v447, %v479
  %v959 = vmul.f32 %v448, %v483
  %v960 = vmul.f32 %v449, %v487
  %v961 = vmul.f32 %v450, %v491
  %v962 = vmul.f32 %v451, %v495
  %v963 = vmul.f32 %v452, %v499
  %v964 = vmul.f32 %v453, %v503
  %v965 = vmul.f32 %v454, %v507
  %v966 = vmul.f32 %v455, %v511
  %v967 = vld [vmem:[%s0] sm:$0xff]
  %v968 = vld [vmem:[%s0 + $0x8] sm:$0xff]
  %v969 = vld [vmem:[%s0 + $0x10] sm:$0xff]
  %v970 = vld [vmem:[%s0 + $0x18] sm:$0xff]
  %v971 = vld [vmem:[%s0 + $0x20] sm:$0xff]
  %v972 = vld [vmem:[%s0 + $0x28] sm:$0xff]
  %v973 = vld [vmem:[%s0 + $0x30] sm:$0xff]
  %v974 = vld [vmem:[%s0 + $0x38] sm:$0xff]
  %v975 = vld [vmem:[%s0 + $0x40] sm:$0xff]
  %v976 = vld [vmem:[%s0 + $0x48] sm:$0xff]
  %v977 = vld [vmem:[%s0 + $0x50] sm:$0xff]
  %v978 = vld [vmem:[%s0 + $0x58] sm:$0xff]
  %v979 = vld [vmem:[%s0 + $0x60] sm:$0xff]
  %v980 = vld [vmem:[%s0 + $0x68] sm:$0xff]
  %v981 = vld [vmem:[%s0 + $0x70] sm:$0xff]
  %v982 = vld [vmem:[%s0 + $0x78] sm:$0xff]
  %v983 = vld [vmem:[%s0 + $0x80] sm:$0xff]
  %v984 = vld [vmem:[%s0 + $0x88] sm:$0xff]
  %v985 = vld [vmem:[%s0 + $0x90] sm:$0xff]
  %v986 = vld [vmem:[%s0 + $0x98] sm:$0xff]
  %v987 = vld [vmem:[%s0 + $0xa0] sm:$0xff]
  %v988 = vld [vmem:[%s0 + $0xa8] sm:$0xff]
  %v989 = vld [vmem:[%s0 + $0xb0] sm:$0xff]
  %v990 = vld [vmem:[%s0 + $0xb8] sm:$0xff]
  %v991 = vld [vmem:[%s0 + $0xc0] sm:$0xff]
  %v992 = vld [vmem:[%s0 + $0xc8] sm:$0xff]
  %v993 = vld [vmem:[%s0 + $0xd0] sm:$0xff]
  %v994 = vld [vmem:[%s0 + $0xd8] sm:$0xff]
  %v995 = vld [vmem:[%s0 + $0xe0] sm:$0xff]
  %v996 = vld [vmem:[%s0 + $0xe8] sm:$0xff]
  %v997 = vld [vmem:[%s0 + $0xf0] sm:$0xff]
  %v998 = vld [vmem:[%s0 + $0xf8] sm:$0xff]
  %v999 = vld [vmem:[%s0 + $0x100] sm:$0xff]
  %v1000 = vld [vmem:[%s0 + $0x108] sm:$0xff]
  %v1001 = vld [vmem:[%s0 + $0x110] sm:$0xff]
  %v1002 = vld [vmem:[%s0 + $0x118] sm:$0xff]
  %v1003 = vld [vmem:[%s0 + $0x120] sm:$0xff]
  %v1004 = vld [vmem:[%s0 + $0x128] sm:$0xff]
  %v1005 = vld [vmem:[%s0 + $0x130] sm:$0xff]
  %v1006 = vld [vmem:[%s0 + $0x138] sm:$0xff]
  %v1007 = vld [vmem:[%s0 + $0x140] sm:$0xff]
  %v1008 = vld [vmem:[%s0 + $0x148] sm:$0xff]
  %v1009 = vld [vmem:[%s0 + $0x150] sm:$0xff]
  %v1010 = vld [vmem:[%s0 + $0x158] sm:$0xff]
  %v1011 = vld [vmem:[%s0 + $0x160] sm:$0xff]
  %v1012 = vld [vmem:[%s0 + $0x168] sm:$0xff]
  %v1013 = vld [vmem:[%s0 + $0x170] sm:$0xff]
  %v1014 = vld [vmem:[%s0 + $0x178] sm:$0xff]
  %v1015 = vld [vmem:[%s0 + $0x180] sm:$0xff]
  %v1016 = vld [vmem:[%s0 + $0x188] sm:$0xff]
  %v1017 = vld [vmem:[%s0 + $0x190] sm:$0xff]
  %v1018 = vld [vmem:[%s0 + $0x198] sm:$0xff]
  %v1019 = vld [vmem:[%s0 + $0x1a0] sm:$0xff]
  %v1020 = vld [vmem:[%s0 + $0x1a8] sm:$0xff]
  %v1021 = vld [vmem:[%s0 + $0x1b0] sm:$0xff]
  %v1022 = vld [vmem:[%s0 + $0x1b8] sm:$0xff]
  %v1023 = vld [vmem:[%s0 + $0x1c0] sm:$0xff]
  %v1024 = vld [vmem:[%s0 + $0x1c8] sm:$0xff]
  %v1025 = vld [vmem:[%s0 + $0x1d0] sm:$0xff]
  %v1026 = vld [vmem:[%s0 + $0x1d8] sm:$0xff]
  %v1027 = vld [vmem:[%s0 + $0x1e0] sm:$0xff]
  %v1028 = vld [vmem:[%s0 + $0x1e8] sm:$0xff]
  %v1029 = vld [vmem:[%s0 + $0x1f0] sm:$0xff]
  %v1030 = vld [vmem:[%s0 + $0x1f8] sm:$0xff]
  %v1031 = vld [vmem:[%s0 + $0x200] sm:$0xff]
  %v1032 = vld [vmem:[%s0 + $0x208] sm:$0xff]
  %v1033 = vld [vmem:[%s0 + $0x210] sm:$0xff]
  %v1034 = vld [vmem:[%s0 + $0x218] sm:$0xff]
  %v1035 = vld [vmem:[%s0 + $0x220] sm:$0xff]
  %v1036 = vld [vmem:[%s0 + $0x228] sm:$0xff]
  %v1037 = vld [vmem:[%s0 + $0x230] sm:$0xff]
  %v1038 = vld [vmem:[%s0 + $0x238] sm:$0xff]
  %v1039 = vld [vmem:[%s0 + $0x240] sm:$0xff]
  %v1040 = vld [vmem:[%s0 + $0x248] sm:$0xff]
  %v1041 = vld [vmem:[%s0 + $0x250] sm:$0xff]
  %v1042 = vld [vmem:[%s0 + $0x258] sm:$0xff]
  %v1043 = vld [vmem:[%s0 + $0x260] sm:$0xff]
  %v1044 = vld [vmem:[%s0 + $0x268] sm:$0xff]
  %v1045 = vld [vmem:[%s0 + $0x270] sm:$0xff]
  %v1046 = vld [vmem:[%s0 + $0x278] sm:$0xff]
  %v1047 = vld [vmem:[%s0 + $0x280] sm:$0xff]
  %v1048 = vld [vmem:[%s0 + $0x288] sm:$0xff]
  %v1049 = vld [vmem:[%s0 + $0x290] sm:$0xff]
  %v1050 = vld [vmem:[%s0 + $0x298] sm:$0xff]
  %v1051 = vld [vmem:[%s0 + $0x2a0] sm:$0xff]
  %v1052 = vld [vmem:[%s0 + $0x2a8] sm:$0xff]
  %v1053 = vld [vmem:[%s0 + $0x2b0] sm:$0xff]
  %v1054 = vld [vmem:[%s0 + $0x2b8] sm:$0xff]
  %v1055 = vld [vmem:[%s0 + $0x2c0] sm:$0xff]
  %v1056 = vld [vmem:[%s0 + $0x2c8] sm:$0xff]
  %v1057 = vld [vmem:[%s0 + $0x2d0] sm:$0xff]
  %v1058 = vld [vmem:[%s0 + $0x2d8] sm:$0xff]
  %v1059 = vld [vmem:[%s0 + $0x2e0] sm:$0xff]
  %v1060 = vld [vmem:[%s0 + $0x2e8] sm:$0xff]
  %v1061 = vld [vmem:[%s0 + $0x2f0] sm:$0xff]
  %v1062 = vld [vmem:[%s0 + $0x2f8] sm:$0xff]
  %v1063 = vld [vmem:[%s0 + $0x300] sm:$0xff]
  %v1064 = vld [vmem:[%s0 + $0x308] sm:$0xff]
  %v1065 = vld [vmem:[%s0 + $0x310] sm:$0xff]
  %v1066 = vld [vmem:[%s0 + $0x318] sm:$0xff]
  %v1067 = vld [vmem:[%s0 + $0x320] sm:$0xff]
  %v1068 = vld [vmem:[%s0 + $0x328] sm:$0xff]
  %v1069 = vld [vmem:[%s0 + $0x330] sm:$0xff]
  %v1070 = vld [vmem:[%s0 + $0x338] sm:$0xff]
  %v1071 = vld [vmem:[%s0 + $0x340] sm:$0xff]
  %v1072 = vld [vmem:[%s0 + $0x348] sm:$0xff]
  %v1073 = vld [vmem:[%s0 + $0x350] sm:$0xff]
  %v1074 = vld [vmem:[%s0 + $0x358] sm:$0xff]
  %v1075 = vld [vmem:[%s0 + $0x360] sm:$0xff]
  %v1076 = vld [vmem:[%s0 + $0x368] sm:$0xff]
  %v1077 = vld [vmem:[%s0 + $0x370] sm:$0xff]
  %v1078 = vld [vmem:[%s0 + $0x378] sm:$0xff]
  %v1079 = vld [vmem:[%s0 + $0x380] sm:$0xff]
  %v1080 = vld [vmem:[%s0 + $0x388] sm:$0xff]
  %v1081 = vld [vmem:[%s0 + $0x390] sm:$0xff]
  %v1082 = vld [vmem:[%s0 + $0x398] sm:$0xff]
  %v1083 = vld [vmem:[%s0 + $0x3a0] sm:$0xff]
  %v1084 = vld [vmem:[%s0 + $0x3a8] sm:$0xff]
  %v1085 = vld [vmem:[%s0 + $0x3b0] sm:$0xff]
  %v1086 = vld [vmem:[%s0 + $0x3b8] sm:$0xff]
  %v1087 = vld [vmem:[%s0 + $0x3c0] sm:$0xff]
  %v1088 = vld [vmem:[%s0 + $0x3c8] sm:$0xff]
  %v1089 = vld [vmem:[%s0 + $0x3d0] sm:$0xff]
  %v1090 = vld [vmem:[%s0 + $0x3d8] sm:$0xff]
  %v1091 = vld [vmem:[%s0 + $0x3e0] sm:$0xff]
  %v1092 = vld [vmem:[%s0 + $0x3e8] sm:$0xff]
  %v1093 = vld [vmem:[%s0 + $0x3f0] sm:$0xff]
  %v1094 = vld [vmem:[%s0 + $0x3f8] sm:$0xff]
  %v1095 = vld [vmem:[%s0 + $0x400] sm:$0xff]
  %v1096 = vld [vmem:[%s0 + $0x408] sm:$0xff]
  %v1097 = vld [vmem:[%s0 + $0x410] sm:$0xff]
  %v1098 = vld [vmem:[%s0 + $0x418] sm:$0xff]
  %v1099 = vld [vmem:[%s0 + $0x420] sm:$0xff]
  %v1100 = vld [vmem:[%s0 + $0x428] sm:$0xff]
  %v1101 = vld [vmem:[%s0 + $0x430] sm:$0xff]
  %v1102 = vld [vmem:[%s0 + $0x438] sm:$0xff]
  %v1103 = vld [vmem:[%s0 + $0x440] sm:$0xff]
  %v1104 = vld [vmem:[%s0 + $0x448] sm:$0xff]
  %v1105 = vld [vmem:[%s0 + $0x450] sm:$0xff]
  %v1106 = vld [vmem:[%s0 + $0x458] sm:$0xff]
  %v1107 = vld [vmem:[%s0 + $0x460] sm:$0xff]
  %v1108 = vld [vmem:[%s0 + $0x468] sm:$0xff]
  %v1109 = vld [vmem:[%s0 + $0x470] sm:$0xff]
  %v1110 = vld [vmem:[%s0 + $0x478] sm:$0xff]
  %v1111 = vld [vmem:[%s0 + $0x480] sm:$0xff]
  %v1112 = vld [vmem:[%s0 + $0x488] sm:$0xff]
  %v1113 = vld [vmem:[%s0 + $0x490] sm:$0xff]
  %v1114 = vld [vmem:[%s0 + $0x498] sm:$0xff]
  %v1115 = vld [vmem:[%s0 + $0x4a0] sm:$0xff]
  %v1116 = vld [vmem:[%s0 + $0x4a8] sm:$0xff]
  %v1117 = vld [vmem:[%s0 + $0x4b0] sm:$0xff]
  %v1118 = vld [vmem:[%s0 + $0x4b8] sm:$0xff]
  %v1119 = vld [vmem:[%s0 + $0x4c0] sm:$0xff]
  %v1120 = vld [vmem:[%s0 + $0x4c8] sm:$0xff]
  %v1121 = vld [vmem:[%s0 + $0x4d0] sm:$0xff]
  %v1122 = vld [vmem:[%s0 + $0x4d8] sm:$0xff]
  %v1123 = vld [vmem:[%s0 + $0x4e0] sm:$0xff]
  %v1124 = vld [vmem:[%s0 + $0x4e8] sm:$0xff]
  %v1125 = vld [vmem:[%s0 + $0x4f0] sm:$0xff]
  %v1126 = vld [vmem:[%s0 + $0x4f8] sm:$0xff]
  %v1127 = vld [vmem:[%s0 + $0x500] sm:$0xff]
  %v1128 = vld [vmem:[%s0 + $0x508] sm:$0xff]
  %v1129 = vld [vmem:[%s0 + $0x510] sm:$0xff]
  %v1130 = vld [vmem:[%s0 + $0x518] sm:$0xff]
  %v1131 = vld [vmem:[%s0 + $0x520] sm:$0xff]
  %v1132 = vld [vmem:[%s0 + $0x528] sm:$0xff]
  %v1133 = vld [vmem:[%s0 + $0x530] sm:$0xff]
  %v1134 = vld [vmem:[%s0 + $0x538] sm:$0xff]
  %v1135 = vld [vmem:[%s0 + $0x540] sm:$0xff]
  %v1136 = vld [vmem:[%s0 + $0x548] sm:$0xff]
  %v1137 = vld [vmem:[%s0 + $0x550] sm:$0xff]
  %v1138 = vld [vmem:[%s0 + $0x558] sm:$0xff]
  %v1139 = vld [vmem:[%s0 + $0x560] sm:$0xff]
  %v1140 = vld [vmem:[%s0 + $0x568] sm:$0xff]
  %v1141 = vld [vmem:[%s0 + $0x570] sm:$0xff]
  %v1142 = vld [vmem:[%s0 + $0x578] sm:$0xff]
  %v1143 = vld [vmem:[%s0 + $0x580] sm:$0xff]
  %v1144 = vld [vmem:[%s0 + $0x588] sm:$0xff]
  %v1145 = vld [vmem:[%s0 + $0x590] sm:$0xff]
  %v1146 = vld [vmem:[%s0 + $0x598] sm:$0xff]
  %v1147 = vld [vmem:[%s0 + $0x5a0] sm:$0xff]
  %v1148 = vld [vmem:[%s0 + $0x5a8] sm:$0xff]
  %v1149 = vld [vmem:[%s0 + $0x5b0] sm:$0xff]
  %v1150 = vld [vmem:[%s0 + $0x5b8] sm:$0xff]
  %v1151 = vld [vmem:[%s0 + $0x5c0] sm:$0xff]
  %v1152 = vld [vmem:[%s0 + $0x5c8] sm:$0xff]
  %v1153 = vld [vmem:[%s0 + $0x5d0] sm:$0xff]
  %v1154 = vld [vmem:[%s0 + $0x5d8] sm:$0xff]
  %v1155 = vld [vmem:[%s0 + $0x5e0] sm:$0xff]
  %v1156 = vld [vmem:[%s0 + $0x5e8] sm:$0xff]
  %v1157 = vld [vmem:[%s0 + $0x5f0] sm:$0xff]
  %v1158 = vld [vmem:[%s0 + $0x5f8] sm:$0xff]
  %v1159 = vld [vmem:[%s0 + $0x600] sm:$0xff]
  %v1160 = vld [vmem:[%s0 + $0x608] sm:$0xff]
  %v1161 = vld [vmem:[%s0 + $0x610] sm:$0xff]
  %v1162 = vld [vmem:[%s0 + $0x618] sm:$0xff]
  %v1163 = vld [vmem:[%s0 + $0x620] sm:$0xff]
  %v1164 = vld [vmem:[%s0 + $0x628] sm:$0xff]
  %v1165 = vld [vmem:[%s0 + $0x630] sm:$0xff]
  %v1166 = vld [vmem:[%s0 + $0x638] sm:$0xff]
  %v1167 = vld [vmem:[%s0 + $0x640] sm:$0xff]
  %v1168 = vld [vmem:[%s0 + $0x648] sm:$0xff]
  %v1169 = vld [vmem:[%s0 + $0x650] sm:$0xff]
  %v1170 = vld [vmem:[%s0 + $0x658] sm:$0xff]
  %vm1171 = vcmask 785408
  %v1173 = vsel %vm1171, %v537, 0
  %v1176 = vsel %vm1171, %v550, 0
  %v1179 = vsel %vm1171, %v563, 0
  %v1182 = vsel %vm1171, %v576, 0
  %v1185 = vsel %vm1171, %v589, 0
  %v1188 = vsel %vm1171, %v602, 0
  %v1191 = vsel %vm1171, %v615, 0
  %v1194 = vsel %vm1171, %v628, 0
  %v1197 = vsel %vm1171, %v641, 0
  %v1200 = vsel %vm1171, %v654, 0
  %v1203 = vsel %vm1171, %v667, 0
  %v1206 = vsel %vm1171, %v680, 0
  %v1209 = vsel %vm1171, %v693, 0
  %v1212 = vsel %vm1171, %v706, 0
  %v1215 = vsel %vm1171, %v719, 0
  %v1218 = vsel %vm1171, %v732, 0
  %v1221 = vsel %vm1171, %v745, 0
  %v1224 = vsel %vm1171, %v758, 0
  %v1227 = vsel %vm1171, %v771, 0
  %v1230 = vsel %vm1171, %v784, 0
  %v1233 = vsel %vm1171, %v797, 0
  %v1236 = vsel %vm1171, %v810, 0
  %v1239 = vsel %vm1171, %v823, 0
  %v1242 = vsel %vm1171, %v836, 0
  %v1245 = vsel %vm1171, %v849, 0
  %v1248 = vsel %vm1171, %v862, 0
  %v1251 = vsel %vm1171, %v875, 0
  %v1254 = vsel %vm1171, %v888, 0
  %v1257 = vsel %vm1171, %v901, 0
  %v1260 = vsel %vm1171, %v914, 0
  %v1263 = vsel %vm1171, %v927, 0
  %v1266 = vsel %vm1171, %v940, 0
  %v1269 = vsel %vm1171, %v953, 0
  %v1272 = vsel %vm1171, %v966, 0
  %1274 = vmatprep.subr.mxu0 0.0
  %1275 = vmatpush1.msra.mxu0 %v967
  %1276 = vmatprep.subr.mxu0 0.0
  %1277 = vmatpush1.msra.mxu0 %v968
  %1278 = vmatprep.subr.mxu0 0.0
  %1279 = vmatpush1.msra.mxu0 %v969
  %1280 = vmatprep.subr.mxu0 0.0
  %1281 = vmatpush1.msra.mxu0 %v970
  %1282 = vmatprep.subr.mxu0 0.0
  %1283 = vmatpush1.msra.mxu0 %v971
  %1284 = vmatprep.subr.mxu0 0.0
  %1285 = vmatpush1.msra.mxu0 %v972
  %1286 = vmatprep.subr.mxu0 0.0
  %1287 = vmatpush1.msra.mxu0 %v973
  %1288 = vmatprep.subr.mxu0 0.0
  %1289 = vmatpush1.msra.mxu0 %v974
  %1290 = vmatprep.subr.mxu0 0.0
  %1291 = vmatpush1.msra.mxu0 %v975
  %1292 = vmatprep.subr.mxu0 0.0
  %1293 = vmatpush1.msra.mxu0 %v976
  %1294 = vmatprep.subr.mxu0 0.0
  %1295 = vmatpush1.msra.mxu0 %v977
  %1296 = vmatprep.subr.mxu0 0.0
  %1297 = vmatpush1.msra.mxu0 %v978
  %1298 = vmatprep.subr.mxu0 0.0
  %1299 = vmatpush1.msra.mxu0 %v979
  %1300 = vmatprep.subr.mxu0 0.0
  %1301 = vmatpush1.msra.mxu0 %v980
  %1302 = vmatprep.subr.mxu0 0.0
  %1303 = vmatpush1.msra.mxu0 %v981
  %1304 = vmatprep.subr.mxu0 0.0
  %1305 = vmatpush1.msra.mxu0 %v982
  %1306 = vmatprep.subr.mxu0 0.0
  %1307 = vmatpush1.msra.mxu0 %v983
  %1308 = vmatprep.subr.mxu0 0.0
  %1309 = vmatpush1.msra.mxu0 %v984
  %1310 = vmatprep.subr.mxu0 0.0
  %1311 = vmatpush1.msra.mxu0 %v985
  %1312 = vmatprep.subr.mxu0 0.0
  %1313 = vmatpush1.msra.mxu0 %v986
  %1314 = vmatprep.subr.mxu0 0.0
  %1315 = vmatpush1.msra.mxu0 %v987
  %1316 = vmatprep.subr.mxu0 0.0
  %1317 = vmatpush1.msra.mxu0 %v988
  %1318 = vmatprep.subr.mxu0 0.0
  %1319 = vmatpush1.msra.mxu0 %v989
  %1320 = vmatprep.subr.mxu0 0.0
  %1321 = vmatpush1.msra.mxu0 %v990
  %1322 = vmatprep.subr.mxu0 0.0
  %1323 = vmatpush1.msra.mxu0 %v991
  %1324 = vmatprep.subr.mxu0 0.0
  %1325 = vmatpush1.msra.mxu0 %v992
  %1326 = vmatprep.subr.mxu0 0.0
  %1327 = vmatpush1.msra.mxu0 %v993
  %1328 = vmatprep.subr.mxu0 0.0
  %1329 = vmatpush1.msra.mxu0 %v994
  %1330 = vmatprep.subr.mxu0 0.0
  %1331 = vmatpush1.msra.mxu0 %v995
  %1332 = vmatprep.subr.mxu0 0.0
  %1333 = vmatpush1.msra.mxu0 %v996
  %1334 = vmatprep.subr.mxu0 0.0
  %1335 = vmatpush1.msra.mxu0 %v997
  %1336 = vmatprep.subr.mxu0 0.0
  %1337 = vmatpush1.msra.mxu0 %v998
  %1338 = vmatprep.mubr.f32.mxu0 %v526
  %1339 = vmatmul.mubr.f32.gmra.mrb[0].mxu0 %v525
  %v1340 = vpop.f32.mrb[0].mxu0
  %v1341 = vadd.f32 0.0, %v1340
  %v1342 = vpop.f32.mrb[0].mxu0
  %1343 = vmatprep.mubr.f32.mxu0 %v539
  %1344 = vmatmul.mubr.f32.gmra.mrb[0].mxu0 %v538
  %v1345 = vpop.f32.mrb[0].mxu0
  %v1346 = vadd.f32 0.0, %v1345
  %v1347 = vpop.f32.mrb[0].mxu0
  %1348 = vmatprep.mubr.f32.mxu0 %v552
  %1349 = vmatmul.mubr.f32.gmra.mrb[0].mxu0 %v551
  %v1350 = vpop.f32.mrb[0].mxu0
  %v1351 = vadd.f32 0.0, %v1350
  %v1352 = vpop.f32.mrb[0].mxu0
  %1353 = vmatprep.mubr.f32.mxu0 %v565
  %1354 = vmatmul.mubr.f32.gmra.mrb[0].mxu0 %v564
  %v1355 = vpop.f32.mrb[0].mxu0
  %v1356 = vadd.f32 0.0, %v1355
  %v1357 = vpop.f32.mrb[0].mxu0
  %1358 = vmatprep.mubr.f32.mxu0 %v578
  %1359 = vmatmul.mubr.f32.gmra.mrb[0].mxu0 %v577
  %v1360 = vpop.f32.mrb[0].mxu0
  %v1361 = vadd.f32 0.0, %v1360
  %v1362 = vpop.f32.mrb[0].mxu0
  %1363 = vmatprep.mubr.f32.mxu0 %v591
  %1364 = vmatmul.mubr.f32.gmra.mrb[0].mxu0 %v590
  %v1365 = vpop.f32.mrb[0].mxu0
  %v1366 = vadd.f32 0.0, %v1365
  %v1367 = vpop.f32.mrb[0].mxu0
  %1368 = vmatprep.mubr.f32.mxu0 %v604
  %1369 = vmatmul.mubr.f32.gmra.mrb[0].mxu0 %v603
  %v1370 = vpop.f32.mrb[0].mxu0
  %v1371 = vadd.f32 0.0, %v1370
  %v1372 = vpop.f32.mrb[0].mxu0
  %1373 = vmatprep.mubr.f32.mxu0 %v617
  %1374 = vmatmul.mubr.f32.gmra.mrb[0].mxu0 %v616
  %v1375 = vpop.f32.mrb[0].mxu0
  %v1376 = vadd.f32 0.0, %v1375
  %v1377 = vpop.f32.mrb[0].mxu0
  %1378 = vmatprep.mubr.f32.mxu0 %v630
  %1379 = vmatmul.mubr.f32.gmra.mrb[0].mxu0 %v629
  %v1380 = vpop.f32.mrb[0].mxu0
  %v1381 = vadd.f32 0.0, %v1380
  %v1382 = vpop.f32.mrb[0].mxu0
  %1383 = vmatprep.mubr.f32.mxu0 %v643
  %1384 = vmatmul.mubr.f32.gmra.mrb[0].mxu0 %v642
  %v1385 = vpop.f32.mrb[0].mxu0
  %v1386 = vadd.f32 0.0, %v1385
  %v1387 = vpop.f32.mrb[0].mxu0
  %1388 = vmatprep.mubr.f32.mxu0 %v656
  %1389 = vmatmul.mubr.f32.gmra.mrb[0].mxu0 %v655
  %v1390 = vpop.f32.mrb[0].mxu0
  %v1391 = vadd.f32 0.0, %v1390
  %v1392 = vpop.f32.mrb[0].mxu0
  %1393 = vmatprep.mubr.f32.mxu0 %v669
  %1394 = vmatmul.mubr.f32.gmra.mrb[0].mxu0 %v668
  %v1395 = vpop.f32.mrb[0].mxu0
  %v1396 = vadd.f32 0.0, %v1395
  %v1397 = vpop.f32.mrb[0].mxu0
  %1398 = vmatprep.mubr.f32.mxu0 %v682
  %1399 = vmatmul.mubr.f32.gmra.mrb[0].mxu0 %v681
  %v1400 = vpop.f32.mrb[0].mxu0
  %v1401 = vadd.f32 0.0, %v1400
  %v1402 = vpop.f32.mrb[0].mxu0
  %1403 = vmatprep.mubr.f32.mxu0 %v695
  %1404 = vmatmul.mubr.f32.gmra.mrb[0].mxu0 %v694
  %v1405 = vpop.f32.mrb[0].mxu0
  %v1406 = vadd.f32 0.0, %v1405
  %v1407 = vpop.f32.mrb[0].mxu0
  %1408 = vmatprep.mubr.f32.mxu0 %v708
  %1409 = vmatmul.mubr.f32.gmra.mrb[0].mxu0 %v707
  %v1410 = vpop.f32.mrb[0].mxu0
  %v1411 = vadd.f32 0.0, %v1410
  %v1412 = vpop.f32.mrb[0].mxu0
  %1413 = vmatprep.mubr.f32.mxu0 %v721
  %1414 = vmatmul.mubr.f32.gmra.mrb[0].mxu0 %v720
  %v1415 = vpop.f32.mrb[0].mxu0
  %v1416 = vadd.f32 0.0, %v1415
  %v1417 = vpop.f32.mrb[0].mxu0
  %1418 = vmatprep.mubr.f32.mxu0 %v734
  %1419 = vmatmul.mubr.f32.gmra.mrb[0].mxu0 %v733
  %v1420 = vpop.f32.mrb[0].mxu0
  %v1421 = vadd.f32 0.0, %v1420
  %v1422 = vpop.f32.mrb[0].mxu0
  %1423 = vmatprep.mubr.f32.mxu0 %v747
  %1424 = vmatmul.mubr.f32.gmra.mrb[0].mxu0 %v746
  %v1425 = vpop.f32.mrb[0].mxu0
  %v1426 = vadd.f32 0.0, %v1425
  %v1427 = vpop.f32.mrb[0].mxu0
  %1428 = vmatprep.mubr.f32.mxu0 %v760
  %1429 = vmatmul.mubr.f32.gmra.mrb[0].mxu0 %v759
  %v1430 = vpop.f32.mrb[0].mxu0
  %v1431 = vadd.f32 0.0, %v1430
  %v1432 = vpop.f32.mrb[0].mxu0
  %1433 = vmatprep.mubr.f32.mxu0 %v773
  %1434 = vmatmul.mubr.f32.gmra.mrb[0].mxu0 %v772
  %v1435 = vpop.f32.mrb[0].mxu0
  %v1436 = vadd.f32 0.0, %v1435
  %v1437 = vpop.f32.mrb[0].mxu0
  %1438 = vmatprep.mubr.f32.mxu0 %v786
  %1439 = vmatmul.mubr.f32.gmra.mrb[0].mxu0 %v785
  %v1440 = vpop.f32.mrb[0].mxu0
  %v1441 = vadd.f32 0.0, %v1440
  %v1442 = vpop.f32.mrb[0].mxu0
  %1443 = vmatprep.mubr.f32.mxu0 %v799
  %1444 = vmatmul.mubr.f32.gmra.mrb[0].mxu0 %v798
  %v1445 = vpop.f32.mrb[0].mxu0
  %v1446 = vadd.f32 0.0, %v1445
  %v1447 = vpop.f32.mrb[0].mxu0
  %1448 = vmatprep.mubr.f32.mxu0 %v812
  %1449 = vmatmul.mubr.f32.gmra.mrb[0].mxu0 %v811
  %v1450 = vpop.f32.mrb[0].mxu0
  %v1451 = vadd.f32 0.0, %v1450
  %v1452 = vpop.f32.mrb[0].mxu0
  %1453 = vmatprep.mubr.f32.mxu0 %v825
  %1454 = vmatmul.mubr.f32.gmra.mrb[0].mxu0 %v824
  %v1455 = vpop.f32.mrb[0].mxu0
  %v1456 = vadd.f32 0.0, %v1455
  %v1457 = vpop.f32.mrb[0].mxu0
  %1458 = vmatprep.mubr.f32.mxu0 %v838
  %1459 = vmatmul.mubr.f32.gmra.mrb[0].mxu0 %v837
  %v1460 = vpop.f32.mrb[0].mxu0
  %v1461 = vadd.f32 0.0, %v1460
  %v1462 = vpop.f32.mrb[0].mxu0
  %1463 = vmatprep.mubr.f32.mxu0 %v851
  %1464 = vmatmul.mubr.f32.gmra.mrb[0].mxu0 %v850
  %v1465 = vpop.f32.mrb[0].mxu0
  %v1466 = vadd.f32 0.0, %v1465
  %v1467 = vpop.f32.mrb[0].mxu0
  %1468 = vmatprep.mubr.f32.mxu0 %v864
  %1469 = vmatmul.mubr.f32.gmra.mrb[0].mxu0 %v863
  %v1470 = vpop.f32.mrb[0].mxu0
  %v1471 = vadd.f32 0.0, %v1470
  %v1472 = vpop.f32.mrb[0].mxu0
  %1473 = vmatprep.mubr.f32.mxu0 %v877
  %1474 = vmatmul.mubr.f32.gmra.mrb[0].mxu0 %v876
  %v1475 = vpop.f32.mrb[0].mxu0
  %v1476 = vadd.f32 0.0, %v1475
  %v1477 = vpop.f32.mrb[0].mxu0
  %1478 = vmatprep.mubr.f32.mxu0 %v890
  %1479 = vmatmul.mubr.f32.gmra.mrb[0].mxu0 %v889
  %v1480 = vpop.f32.mrb[0].mxu0
  %v1481 = vadd.f32 0.0, %v1480
  %v1482 = vpop.f32.mrb[0].mxu0
  %1483 = vmatprep.mubr.f32.mxu0 %v903
  %1484 = vmatmul.mubr.f32.gmra.mrb[0].mxu0 %v902
  %v1485 = vpop.f32.mrb[0].mxu0
  %v1486 = vadd.f32 0.0, %v1485
  %v1487 = vpop.f32.mrb[0].mxu0
  %1488 = vmatprep.mubr.f32.mxu0 %v916
  %1489 = vmatmul.mubr.f32.gmra.mrb[0].mxu0 %v915
  %v1490 = vpop.f32.mrb[0].mxu0
  %v1491 = vadd.f32 0.0, %v1490
  %v1492 = vpop.f32.mrb[0].mxu0
  %1493 = vmatprep.mubr.f32.mxu0 %v929
  %1494 = vmatmul.mubr.f32.gmra.mrb[0].mxu0 %v928
  %v1495 = vpop.f32.mrb[0].mxu0
  %v1496 = vadd.f32 0.0, %v1495
  %v1497 = vpop.f32.mrb[0].mxu0
  %1498 = vmatprep.mubr.f32.mxu0 %v942
  %1499 = vmatmul.mubr.f32.gmra.mrb[0].mxu0 %v941
  %v1500 = vpop.f32.mrb[0].mxu0
  %v1501 = vadd.f32 0.0, %v1500
  %v1502 = vpop.f32.mrb[0].mxu0
  %1503 = vmatprep.mubr.f32.mxu0 %v955
  %1504 = vmatmul.mubr.f32.gmra.mrb[0].mxu0 %v954
  %v1505 = vpop.f32.mrb[0].mxu0
  %v1506 = vadd.f32 0.0, %v1505
  %v1507 = vpop.f32.mrb[0].mxu0
  %1508 = vdwg.mxu0
  %1509 = vmatprep.subr.mxu0 0.0
  %1510 = vmatpush1.msra.mxu0 %v999
  %1511 = vmatprep.subr.mxu0 0.0
  %1512 = vmatpush1.msra.mxu0 %v1000
  %1513 = vmatprep.subr.mxu0 0.0
  %1514 = vmatpush1.msra.mxu0 %v1001
  %1515 = vmatprep.subr.mxu0 0.0
  %1516 = vmatpush1.msra.mxu0 %v1002
  %1517 = vmatprep.subr.mxu0 0.0
  %1518 = vmatpush1.msra.mxu0 %v1003
  %1519 = vmatprep.subr.mxu0 0.0
  %1520 = vmatpush1.msra.mxu0 %v1004
  %1521 = vmatprep.subr.mxu0 0.0
  %1522 = vmatpush1.msra.mxu0 %v1005
  %1523 = vmatprep.subr.mxu0 0.0
  %1524 = vmatpush1.msra.mxu0 %v1006
  %1525 = vmatprep.subr.mxu0 0.0
  %1526 = vmatpush1.msra.mxu0 %v1007
  %1527 = vmatprep.subr.mxu0 0.0
  %1528 = vmatpush1.msra.mxu0 %v1008
  %1529 = vmatprep.subr.mxu0 0.0
  %1530 = vmatpush1.msra.mxu0 %v1009
  %1531 = vmatprep.subr.mxu0 0.0
  %1532 = vmatpush1.msra.mxu0 %v1010
  %1533 = vmatprep.subr.mxu0 0.0
  %1534 = vmatpush1.msra.mxu0 %v1011
  %1535 = vmatprep.subr.mxu0 0.0
  %1536 = vmatpush1.msra.mxu0 %v1012
  %1537 = vmatprep.subr.mxu0 0.0
  %1538 = vmatpush1.msra.mxu0 %v1013
  %1539 = vmatprep.subr.mxu0 0.0
  %1540 = vmatpush1.msra.mxu0 %v1014
  %1541 = vmatprep.subr.mxu0 0.0
  %1542 = vmatpush1.msra.mxu0 %v1015
  %1543 = vmatprep.subr.mxu0 0.0
  %1544 = vmatpush1.msra.mxu0 %v1016
  %1545 = vmatprep.subr.mxu0 0.0
  %1546 = vmatpush1.msra.mxu0 %v1017
  %1547 = vmatprep.subr.mxu0 0.0
  %1548 = vmatpush1.msra.mxu0 %v1018
  %1549 = vmatprep.subr.mxu0 0.0
  %1550 = vmatpush1.msra.mxu0 %v1019
  %1551 = vmatprep.subr.mxu0 0.0
  %1552 = vmatpush1.msra.mxu0 %v1020
  %1553 = vmatprep.subr.mxu0 0.0
  %1554 = vmatpush1.msra.mxu0 %v1021
  %1555 = vmatprep.subr.mxu0 0.0
  %1556 = vmatpush1.msra.mxu0 %v1022
  %1557 = vmatprep.subr.mxu0 0.0
  %1558 = vmatpush1.msra.mxu0 %v1023
  %1559 = vmatprep.subr.mxu0 0.0
  %1560 = vmatpush1.msra.mxu0 %v1024
  %1561 = vmatprep.subr.mxu0 0.0
  %1562 = vmatpush1.msra.mxu0 %v1025
  %1563 = vmatprep.subr.mxu0 0.0
  %1564 = vmatpush1.msra.mxu0 %v1026
  %1565 = vmatprep.subr.mxu0 0.0
  %1566 = vmatpush1.msra.mxu0 %v1027
  %1567 = vmatprep.subr.mxu0 0.0
  %1568 = vmatpush1.msra.mxu0 %v1028
  %1569 = vmatprep.subr.mxu0 0.0
  %1570 = vmatpush1.msra.mxu0 %v1029
  %1571 = vmatprep.subr.mxu0 0.0
  %1572 = vmatpush1.msra.mxu0 %v1030
  %1573 = vmatprep.mubr.f32.mxu0 %v528
  %1574 = vmatmul.mubr.f32.gmra.mrb[0].mxu0 %v527
  %v1575 = vpop.f32.mrb[0].mxu0
  %v1576 = vadd.f32 %v1341, %v1575
  %v1577 = vpop.f32.mrb[0].mxu0
  %1578 = vmatprep.mubr.f32.mxu0 %v541
  %1579 = vmatmul.mubr.f32.gmra.mrb[0].mxu0 %v540
  %v1580 = vpop.f32.mrb[0].mxu0
  %v1581 = vadd.f32 %v1346, %v1580
  %v1582 = vpop.f32.mrb[0].mxu0
  %1583 = vmatprep.mubr.f32.mxu0 %v554
  %1584 = vmatmul.mubr.f32.gmra.mrb[0].mxu0 %v553
  %v1585 = vpop.f32.mrb[0].mxu0
  %v1586 = vadd.f32 %v1351, %v1585
  %v1587 = vpop.f32.mrb[0].mxu0
  %1588 = vmatprep.mubr.f32.mxu0 %v567
  %1589 = vmatmul.mubr.f32.gmra.mrb[0].mxu0 %v566
  %v1590 = vpop.f32.mrb[0].mxu0
  %v1591 = vadd.f32 %v1356, %v1590
  %v1592 = vpop.f32.mrb[0].mxu0
  %1593 = vmatprep.mubr.f32.mxu0 %v580
  %1594 = vmatmul.mubr.f32.gmra.mrb[0].mxu0 %v579
  %v1595 = vpop.f32.mrb[0].mxu0
  %v1596 = vadd.f32 %v1361, %v1595
  %v1597 = vpop.f32.mrb[0].mxu0
  %1598 = vmatprep.mubr.f32.mxu0 %v593
  %1599 = vmatmul.mubr.f32.gmra.mrb[0].mxu0 %v592
  %v1600 = vpop.f32.mrb[0].mxu0
  %v1601 = vadd.f32 %v1366, %v1600
  %v1602 = vpop.f32.mrb[0].mxu0
  %1603 = vmatprep.mubr.f32.mxu0 %v606
  %1604 = vmatmul.mubr.f32.gmra.mrb[0].mxu0 %v605
  %v1605 = vpop.f32.mrb[0].mxu0
  %v1606 = vadd.f32 %v1371, %v1605
  %v1607 = vpop.f32.mrb[0].mxu0
  %1608 = vmatprep.mubr.f32.mxu0 %v619
  %1609 = vmatmul.mubr.f32.gmra.mrb[0].mxu0 %v618
  %v1610 = vpop.f32.mrb[0].mxu0
  %v1611 = vadd.f32 %v1376, %v1610
  %v1612 = vpop.f32.mrb[0].mxu0
  %1613 = vmatprep.mubr.f32.mxu0 %v632
  %1614 = vmatmul.mubr.f32.gmra.mrb[0].mxu0 %v631
  %v1615 = vpop.f32.mrb[0].mxu0
  %v1616 = vadd.f32 %v1381, %v1615
  %v1617 = vpop.f32.mrb[0].mxu0
  %1618 = vmatprep.mubr.f32.mxu0 %v645
  %1619 = vmatmul.mubr.f32.gmra.mrb[0].mxu0 %v644
  %v1620 = vpop.f32.mrb[0].mxu0
  %v1621 = vadd.f32 %v1386, %v1620
  %v1622 = vpop.f32.mrb[0].mxu0
  %1623 = vmatprep.mubr.f32.mxu0 %v658
  %1624 = vmatmul.mubr.f32.gmra.mrb[0].mxu0 %v657
  %v1625 = vpop.f32.mrb[0].mxu0
  %v1626 = vadd.f32 %v1391, %v1625
  %v1627 = vpop.f32.mrb[0].mxu0
  %1628 = vmatprep.mubr.f32.mxu0 %v671
  %1629 = vmatmul.mubr.f32.gmra.mrb[0].mxu0 %v670
  %v1630 = vpop.f32.mrb[0].mxu0
  %v1631 = vadd.f32 %v1396, %v1630
  %v1632 = vpop.f32.mrb[0].mxu0
  %1633 = vmatprep.mubr.f32.mxu0 %v684
  %1634 = vmatmul.mubr.f32.gmra.mrb[0].mxu0 %v683
  %v1635 = vpop.f32.mrb[0].mxu0
  %v1636 = vadd.f32 %v1401, %v1635
  %v1637 = vpop.f32.mrb[0].mxu0
  %1638 = vmatprep.mubr.f32.mxu0 %v697
  %1639 = vmatmul.mubr.f32.gmra.mrb[0].mxu0 %v696
  %v1640 = vpop.f32.mrb[0].mxu0
  %v1641 = vadd.f32 %v1406, %v1640
  %v1642 = vpop.f32.mrb[0].mxu0
  %1643 = vmatprep.mubr.f32.mxu0 %v710
  %1644 = vmatmul.mubr.f32.gmra.mrb[0].mxu0 %v709
  %v1645 = vpop.f32.mrb[0].mxu0
  %v1646 = vadd.f32 %v1411, %v1645
  %v1647 = vpop.f32.mrb[0].mxu0
  %1648 = vmatprep.mubr.f32.mxu0 %v723
  %1649 = vmatmul.mubr.f32.gmra.mrb[0].mxu0 %v722
  %v1650 = vpop.f32.mrb[0].mxu0
  %v1651 = vadd.f32 %v1416, %v1650
  %v1652 = vpop.f32.mrb[0].mxu0
  %1653 = vmatprep.mubr.f32.mxu0 %v736
  %1654 = vmatmul.mubr.f32.gmra.mrb[0].mxu0 %v735
  %v1655 = vpop.f32.mrb[0].mxu0
  %v1656 = vadd.f32 %v1421, %v1655
  %v1657 = vpop.f32.mrb[0].mxu0
  %1658 = vmatprep.mubr.f32.mxu0 %v749
  %1659 = vmatmul.mubr.f32.gmra.mrb[0].mxu0 %v748
  %v1660 = vpop.f32.mrb[0].mxu0
  %v1661 = vadd.f32 %v1426, %v1660
  %v1662 = vpop.f32.mrb[0].mxu0
  %1663 = vmatprep.mubr.f32.mxu0 %v762
  %1664 = vmatmul.mubr.f32.gmra.mrb[0].mxu0 %v761
  %v1665 = vpop.f32.mrb[0].mxu0
  %v1666 = vadd.f32 %v1431, %v1665
  %v1667 = vpop.f32.mrb[0].mxu0
  %1668 = vmatprep.mubr.f32.mxu0 %v775
  %1669 = vmatmul.mubr.f32.gmra.mrb[0].mxu0 %v774
  %v1670 = vpop.f32.mrb[0].mxu0
  %v1671 = vadd.f32 %v1436, %v1670
  %v1672 = vpop.f32.mrb[0].mxu0
  %1673 = vmatprep.mubr.f32.mxu0 %v788
  %1674 = vmatmul.mubr.f32.gmra.mrb[0].mxu0 %v787
  %v1675 = vpop.f32.mrb[0].mxu0
  %v1676 = vadd.f32 %v1441, %v1675
  %v1677 = vpop.f32.mrb[0].mxu0
  %1678 = vmatprep.mubr.f32.mxu0 %v801
  %1679 = vmatmul.mubr.f32.gmra.mrb[0].mxu0 %v800
  %v1680 = vpop.f32.mrb[0].mxu0
  %v1681 = vadd.f32 %v1446, %v1680
  %v1682 = vpop.f32.mrb[0].mxu0
  %1683 = vmatprep.mubr.f32.mxu0 %v814
  %1684 = vmatmul.mubr.f32.gmra.mrb[0].mxu0 %v813
  %v1685 = vpop.f32.mrb[0].mxu0
  %v1686 = vadd.f32 %v1451, %v1685
  %v1687 = vpop.f32.mrb[0].mxu0
  %1688 = vmatprep.mubr.f32.mxu0 %v827
  %1689 = vmatmul.mubr.f32.gmra.mrb[0].mxu0 %v826
  %v1690 = vpop.f32.mrb[0].mxu0
  %v1691 = vadd.f32 %v1456, %v1690
  %v1692 = vpop.f32.mrb[0].mxu0
  %1693 = vmatprep.mubr.f32.mxu0 %v840
  %1694 = vmatmul.mubr.f32.gmra.mrb[0].mxu0 %v839
  %v1695 = vpop.f32.mrb[0].mxu0
  %v1696 = vadd.f32 %v1461, %v1695
  %v1697 = vpop.f32.mrb[0].mxu0
  %1698 = vmatprep.mubr.f32.mxu0 %v853
  %1699 = vmatmul.mubr.f32.gmra.mrb[0].mxu0 %v852
  %v1700 = vpop.f32.mrb[0].mxu0
  %v1701 = vadd.f32 %v1466, %v1700
  %v1702 = vpop.f32.mrb[0].mxu0
  %1703 = vmatprep.mubr.f32.mxu0 %v866
  %1704 = vmatmul.mubr.f32.gmra.mrb[0].mxu0 %v865
  %v1705 = vpop.f32.mrb[0].mxu0
  %v1706 = vadd.f32 %v1471, %v1705
  %v1707 = vpop.f32.mrb[0].mxu0
  %1708 = vmatprep.mubr.f32.mxu0 %v879
  %1709 = vmatmul.mubr.f32.gmra.mrb[0].mxu0 %v878
  %v1710 = vpop.f32.mrb[0].mxu0
  %v1711 = vadd.f32 %v1476, %v1710
  %v1712 = vpop.f32.mrb[0].mxu0
  %1713 = vmatprep.mubr.f32.mxu0 %v892
  %1714 = vmatmul.mubr.f32.gmra.mrb[0].mxu0 %v891
  %v1715 = vpop.f32.mrb[0].mxu0
  %v1716 = vadd.f32 %v1481, %v1715
  %v1717 = vpop.f32.mrb[0].mxu0
  %1718 = vmatprep.mubr.f32.mxu0 %v905
  %1719 = vmatmul.mubr.f32.gmra.mrb[0].mxu0 %v904
  %v1720 = vpop.f32.mrb[0].mxu0
  %v1721 = vadd.f32 %v1486, %v1720
  %v1722 = vpop.f32.mrb[0].mxu0
  %1723 = vmatprep.mubr.f32.mxu0 %v918
  %1724 = vmatmul.mubr.f32.gmra.mrb[0].mxu0 %v917
  %v1725 = vpop.f32.mrb[0].mxu0
  %v1726 = vadd.f32 %v1491, %v1725
  %v1727 = vpop.f32.mrb[0].mxu0
  %1728 = vmatprep.mubr.f32.mxu0 %v931
  %1729 = vmatmul.mubr.f32.gmra.mrb[0].mxu0 %v930
  %v1730 = vpop.f32.mrb[0].mxu0
  %v1731 = vadd.f32 %v1496, %v1730
  %v1732 = vpop.f32.mrb[0].mxu0
  %1733 = vmatprep.mubr.f32.mxu0 %v944
  %1734 = vmatmul.mubr.f32.gmra.mrb[0].mxu0 %v943
  %v1735 = vpop.f32.mrb[0].mxu0
  %v1736 = vadd.f32 %v1501, %v1735
  %v1737 = vpop.f32.mrb[0].mxu0
  %1738 = vmatprep.mubr.f32.mxu0 %v957
  %1739 = vmatmul.mubr.f32.gmra.mrb[0].mxu0 %v956
  %v1740 = vpop.f32.mrb[0].mxu0
  %v1741 = vadd.f32 %v1506, %v1740
  %v1742 = vpop.f32.mrb[0].mxu0
  %1743 = vdwg.mxu0
  %1744 = vmatprep.subr.mxu0 0.0
  %1745 = vmatpush1.msra.mxu0 %v1031
  %1746 = vmatprep.subr.mxu0 0.0
  %1747 = vmatpush1.msra.mxu0 %v1032
  %1748 = vmatprep.subr.mxu0 0.0
  %1749 = vmatpush1.msra.mxu0 %v1033
  %1750 = vmatprep.subr.mxu0 0.0
  %1751 = vmatpush1.msra.mxu0 %v1034
  %1752 = vmatprep.subr.mxu0 0.0
  %1753 = vmatpush1.msra.mxu0 %v1035
  %1754 = vmatprep.subr.mxu0 0.0
  %1755 = vmatpush1.msra.mxu0 %v1036
  %1756 = vmatprep.subr.mxu0 0.0
  %1757 = vmatpush1.msra.mxu0 %v1037
  %1758 = vmatprep.subr.mxu0 0.0
  %1759 = vmatpush1.msra.mxu0 %v1038
  %1760 = vmatprep.subr.mxu0 0.0
  %1761 = vmatpush1.msra.mxu0 %v1039
  %1762 = vmatprep.subr.mxu0 0.0
  %1763 = vmatpush1.msra.mxu0 %v1040
  %1764 = vmatprep.subr.mxu0 0.0
  %1765 = vmatpush1.msra.mxu0 %v1041
  %1766 = vmatprep.subr.mxu0 0.0
  %1767 = vmatpush1.msra.mxu0 %v1042
  %1768 = vmatprep.subr.mxu0 0.0
  %1769 = vmatpush1.msra.mxu0 %v1043
  %1770 = vmatprep.subr.mxu0 0.0
  %1771 = vmatpush1.msra.mxu0 %v1044
  %1772 = vmatprep.subr.mxu0 0.0
  %1773 = vmatpush1.msra.mxu0 %v1045
  %1774 = vmatprep.subr.mxu0 0.0
  %1775 = vmatpush1.msra.mxu0 %v1046
  %1776 = vmatprep.subr.mxu0 0.0
  %1777 = vmatpush1.msra.mxu0 %v1047
  %1778 = vmatprep.subr.mxu0 0.0
  %1779 = vmatpush1.msra.mxu0 %v1048
  %1780 = vmatprep.subr.mxu0 0.0
  %1781 = vmatpush1.msra.mxu0 %v1049
  %1782 = vmatprep.subr.mxu0 0.0
  %1783 = vmatpush1.msra.mxu0 %v1050
  %1784 = vmatprep.subr.mxu0 0.0
  %1785 = vmatpush1.msra.mxu0 %v1051
  %1786 = vmatprep.subr.mxu0 0.0
  %1787 = vmatpush1.msra.mxu0 %v1052
  %1788 = vmatprep.subr.mxu0 0.0
  %1789 = vmatpush1.msra.mxu0 %v1053
  %1790 = vmatprep.subr.mxu0 0.0
  %1791 = vmatpush1.msra.mxu0 %v1054
  %1792 = vmatprep.subr.mxu0 0.0
  %1793 = vmatpush1.msra.mxu0 %v1055
  %1794 = vmatprep.subr.mxu0 0.0
  %1795 = vmatpush1.msra.mxu0 %v1056
  %1796 = vmatprep.subr.mxu0 0.0
  %1797 = vmatpush1.msra.mxu0 %v1057
  %1798 = vmatprep.subr.mxu0 0.0
  %1799 = vmatpush1.msra.mxu0 %v1058
  %1800 = vmatprep.subr.mxu0 0.0
  %1801 = vmatpush1.msra.mxu0 %v1059
  %1802 = vmatprep.subr.mxu0 0.0
  %1803 = vmatpush1.msra.mxu0 %v1060
  %1804 = vmatprep.subr.mxu0 0.0
  %1805 = vmatpush1.msra.mxu0 %v1061
  %1806 = vmatprep.subr.mxu0 0.0
  %1807 = vmatpush1.msra.mxu0 %v1062
  %1808 = vmatprep.mubr.f32.mxu0 %v530
  %1809 = vmatmul.mubr.f32.gmra.mrb[0].mxu0 %v529
  %v1810 = vpop.f32.mrb[0].mxu0
  %v1811 = vadd.f32 %v1576, %v1810
  %v1812 = vpop.f32.mrb[0].mxu0
  %1813 = vmatprep.mubr.f32.mxu0 %v543
  %1814 = vmatmul.mubr.f32.gmra.mrb[0].mxu0 %v542
  %v1815 = vpop.f32.mrb[0].mxu0
  %v1816 = vadd.f32 %v1581, %v1815
  %v1817 = vpop.f32.mrb[0].mxu0
  %1818 = vmatprep.mubr.f32.mxu0 %v556
  %1819 = vmatmul.mubr.f32.gmra.mrb[0].mxu0 %v555
  %v1820 = vpop.f32.mrb[0].mxu0
  %v1821 = vadd.f32 %v1586, %v1820
  %v1822 = vpop.f32.mrb[0].mxu0
  %1823 = vmatprep.mubr.f32.mxu0 %v569
  %1824 = vmatmul.mubr.f32.gmra.mrb[0].mxu0 %v568
  %v1825 = vpop.f32.mrb[0].mxu0
  %v1826 = vadd.f32 %v1591, %v1825
  %v1827 = vpop.f32.mrb[0].mxu0
  %1828 = vmatprep.mubr.f32.mxu0 %v582
  %1829 = vmatmul.mubr.f32.gmra.mrb[0].mxu0 %v581
  %v1830 = vpop.f32.mrb[0].mxu0
  %v1831 = vadd.f32 %v1596, %v1830
  %v1832 = vpop.f32.mrb[0].mxu0
  %1833 = vmatprep.mubr.f32.mxu0 %v595
  %1834 = vmatmul.mubr.f32.gmra.mrb[0].mxu0 %v594
  %v1835 = vpop.f32.mrb[0].mxu0
  %v1836 = vadd.f32 %v1601, %v1835
  %v1837 = vpop.f32.mrb[0].mxu0
  %1838 = vmatprep.mubr.f32.mxu0 %v608
  %1839 = vmatmul.mubr.f32.gmra.mrb[0].mxu0 %v607
  %v1840 = vpop.f32.mrb[0].mxu0
  %v1841 = vadd.f32 %v1606, %v1840
  %v1842 = vpop.f32.mrb[0].mxu0
  %1843 = vmatprep.mubr.f32.mxu0 %v621
  %1844 = vmatmul.mubr.f32.gmra.mrb[0].mxu0 %v620
  %v1845 = vpop.f32.mrb[0].mxu0
  %v1846 = vadd.f32 %v1611, %v1845
  %v1847 = vpop.f32.mrb[0].mxu0
  %1848 = vmatprep.mubr.f32.mxu0 %v634
  %1849 = vmatmul.mubr.f32.gmra.mrb[0].mxu0 %v633
  %v1850 = vpop.f32.mrb[0].mxu0
  %v1851 = vadd.f32 %v1616, %v1850
  %v1852 = vpop.f32.mrb[0].mxu0
  %1853 = vmatprep.mubr.f32.mxu0 %v647
  %1854 = vmatmul.mubr.f32.gmra.mrb[0].mxu0 %v646
  %v1855 = vpop.f32.mrb[0].mxu0
  %v1856 = vadd.f32 %v1621, %v1855
  %v1857 = vpop.f32.mrb[0].mxu0
  %1858 = vmatprep.mubr.f32.mxu0 %v660
  %1859 = vmatmul.mubr.f32.gmra.mrb[0].mxu0 %v659
  %v1860 = vpop.f32.mrb[0].mxu0
  %v1861 = vadd.f32 %v1626, %v1860
  %v1862 = vpop.f32.mrb[0].mxu0
  %1863 = vmatprep.mubr.f32.mxu0 %v673
  %1864 = vmatmul.mubr.f32.gmra.mrb[0].mxu0 %v672
  %v1865 = vpop.f32.mrb[0].mxu0
  %v1866 = vadd.f32 %v1631, %v1865
  %v1867 = vpop.f32.mrb[0].mxu0
  %1868 = vmatprep.mubr.f32.mxu0 %v686
  %1869 = vmatmul.mubr.f32.gmra.mrb[0].mxu0 %v685
  %v1870 = vpop.f32.mrb[0].mxu0
  %v1871 = vadd.f32 %v1636, %v1870
  %v1872 = vpop.f32.mrb[0].mxu0
  %1873 = vmatprep.mubr.f32.mxu0 %v699
  %1874 = vmatmul.mubr.f32.gmra.mrb[0].mxu0 %v698
  %v1875 = vpop.f32.mrb[0].mxu0
  %v1876 = vadd.f32 %v1641, %v1875
  %v1877 = vpop.f32.mrb[0].mxu0
  %1878 = vmatprep.mubr.f32.mxu0 %v712
  %1879 = vmatmul.mubr.f32.gmra.mrb[0].mxu0 %v711
  %v1880 = vpop.f32.mrb[0].mxu0
  %v1881 = vadd.f32 %v1646, %v1880
  %v1882 = vpop.f32.mrb[0].mxu0
  %1883 = vmatprep.mubr.f32.mxu0 %v725
  %1884 = vmatmul.mubr.f32.gmra.mrb[0].mxu0 %v724
  %v1885 = vpop.f32.mrb[0].mxu0
  %v1886 = vadd.f32 %v1651, %v1885
  %v1887 = vpop.f32.mrb[0].mxu0
  %1888 = vmatprep.mubr.f32.mxu0 %v738
  %1889 = vmatmul.mubr.f32.gmra.mrb[0].mxu0 %v737
  %v1890 = vpop.f32.mrb[0].mxu0
  %v1891 = vadd.f32 %v1656, %v1890
  %v1892 = vpop.f32.mrb[0].mxu0
  %1893 = vmatprep.mubr.f32.mxu0 %v751
  %1894 = vmatmul.mubr.f32.gmra.mrb[0].mxu0 %v750
  %v1895 = vpop.f32.mrb[0].mxu0
  %v1896 = vadd.f32 %v1661, %v1895
  %v1897 = vpop.f32.mrb[0].mxu0
  %1898 = vmatprep.mubr.f32.mxu0 %v764
  %1899 = vmatmul.mubr.f32.gmra.mrb[0].mxu0 %v763
  %v1900 = vpop.f32.mrb[0].mxu0
  %v1901 = vadd.f32 %v1666, %v1900
  %v1902 = vpop.f32.mrb[0].mxu0
  %1903 = vmatprep.mubr.f32.mxu0 %v777
  %1904 = vmatmul.mubr.f32.gmra.mrb[0].mxu0 %v776
  %v1905 = vpop.f32.mrb[0].mxu0
  %v1906 = vadd.f32 %v1671, %v1905
  %v1907 = vpop.f32.mrb[0].mxu0
  %1908 = vmatprep.mubr.f32.mxu0 %v790
  %1909 = vmatmul.mubr.f32.gmra.mrb[0].mxu0 %v789
  %v1910 = vpop.f32.mrb[0].mxu0
  %v1911 = vadd.f32 %v1676, %v1910
  %v1912 = vpop.f32.mrb[0].mxu0
  %1913 = vmatprep.mubr.f32.mxu0 %v803
  %1914 = vmatmul.mubr.f32.gmra.mrb[0].mxu0 %v802
  %v1915 = vpop.f32.mrb[0].mxu0
  %v1916 = vadd.f32 %v1681, %v1915
  %v1917 = vpop.f32.mrb[0].mxu0
  %1918 = vmatprep.mubr.f32.mxu0 %v816
  %1919 = vmatmul.mubr.f32.gmra.mrb[0].mxu0 %v815
  %v1920 = vpop.f32.mrb[0].mxu0
  %v1921 = vadd.f32 %v1686, %v1920
  %v1922 = vpop.f32.mrb[0].mxu0
  %1923 = vmatprep.mubr.f32.mxu0 %v829
  %1924 = vmatmul.mubr.f32.gmra.mrb[0].mxu0 %v828
  %v1925 = vpop.f32.mrb[0].mxu0
  %v1926 = vadd.f32 %v1691, %v1925
  %v1927 = vpop.f32.mrb[0].mxu0
  %1928 = vmatprep.mubr.f32.mxu0 %v842
  %1929 = vmatmul.mubr.f32.gmra.mrb[0].mxu0 %v841
  %v1930 = vpop.f32.mrb[0].mxu0
  %v1931 = vadd.f32 %v1696, %v1930
  %v1932 = vpop.f32.mrb[0].mxu0
  %1933 = vmatprep.mubr.f32.mxu0 %v855
  %1934 = vmatmul.mubr.f32.gmra.mrb[0].mxu0 %v854
  %v1935 = vpop.f32.mrb[0].mxu0
  %v1936 = vadd.f32 %v1701, %v1935
  %v1937 = vpop.f32.mrb[0].mxu0
  %1938 = vmatprep.mubr.f32.mxu0 %v868
  %1939 = vmatmul.mubr.f32.gmra.mrb[0].mxu0 %v867
  %v1940 = vpop.f32.mrb[0].mxu0
  %v1941 = vadd.f32 %v1706, %v1940
  %v1942 = vpop.f32.mrb[0].mxu0
  %1943 = vmatprep.mubr.f32.mxu0 %v881
  %1944 = vmatmul.mubr.f32.gmra.mrb[0].mxu0 %v880
  %v1945 = vpop.f32.mrb[0].mxu0
  %v1946 = vadd.f32 %v1711, %v1945
  %v1947 = vpop.f32.mrb[0].mxu0
  %1948 = vmatprep.mubr.f32.mxu0 %v894
  %1949 = vmatmul.mubr.f32.gmra.mrb[0].mxu0 %v893
  %v1950 = vpop.f32.mrb[0].mxu0
  %v1951 = vadd.f32 %v1716, %v1950
  %v1952 = vpop.f32.mrb[0].mxu0
  %1953 = vmatprep.mubr.f32.mxu0 %v907
  %1954 = vmatmul.mubr.f32.gmra.mrb[0].mxu0 %v906
  %v1955 = vpop.f32.mrb[0].mxu0
  %v1956 = vadd.f32 %v1721, %v1955
  %v1957 = vpop.f32.mrb[0].mxu0
  %1958 = vmatprep.mubr.f32.mxu0 %v920
  %1959 = vmatmul.mubr.f32.gmra.mrb[0].mxu0 %v919
  %v1960 = vpop.f32.mrb[0].mxu0
  %v1961 = vadd.f32 %v1726, %v1960
  %v1962 = vpop.f32.mrb[0].mxu0
  %1963 = vmatprep.mubr.f32.mxu0 %v933
  %1964 = vmatmul.mubr.f32.gmra.mrb[0].mxu0 %v932
  %v1965 = vpop.f32.mrb[0].mxu0
  %v1966 = vadd.f32 %v1731, %v1965
  %v1967 = vpop.f32.mrb[0].mxu0
  %1968 = vmatprep.mubr.f32.mxu0 %v946
  %1969 = vmatmul.mubr.f32.gmra.mrb[0].mxu0 %v945
  %v1970 = vpop.f32.mrb[0].mxu0
  %v1971 = vadd.f32 %v1736, %v1970
  %v1972 = vpop.f32.mrb[0].mxu0
  %1973 = vmatprep.mubr.f32.mxu0 %v959
  %1974 = vmatmul.mubr.f32.gmra.mrb[0].mxu0 %v958
  %v1975 = vpop.f32.mrb[0].mxu0
  %v1976 = vadd.f32 %v1741, %v1975
  %v1977 = vpop.f32.mrb[0].mxu0
  %1978 = vdwg.mxu0
  %1979 = vmatprep.subr.mxu0 0.0
  %1980 = vmatpush1.msra.mxu0 %v1063
  %1981 = vmatprep.subr.mxu0 0.0
  %1982 = vmatpush1.msra.mxu0 %v1064
  %1983 = vmatprep.subr.mxu0 0.0
  %1984 = vmatpush1.msra.mxu0 %v1065
  %1985 = vmatprep.subr.mxu0 0.0
  %1986 = vmatpush1.msra.mxu0 %v1066
  %1987 = vmatprep.subr.mxu0 0.0
  %1988 = vmatpush1.msra.mxu0 %v1067
  %1989 = vmatprep.subr.mxu0 0.0
  %1990 = vmatpush1.msra.mxu0 %v1068
  %1991 = vmatprep.subr.mxu0 0.0
  %1992 = vmatpush1.msra.mxu0 %v1069
  %1993 = vmatprep.subr.mxu0 0.0
  %1994 = vmatpush1.msra.mxu0 %v1070
  %1995 = vmatprep.subr.mxu0 0.0
  %1996 = vmatpush1.msra.mxu0 %v1071
  %1997 = vmatprep.subr.mxu0 0.0
  %1998 = vmatpush1.msra.mxu0 %v1072
  %1999 = vmatprep.subr.mxu0 0.0
  %2000 = vmatpush1.msra.mxu0 %v1073
  %2001 = vmatprep.subr.mxu0 0.0
  %2002 = vmatpush1.msra.mxu0 %v1074
  %2003 = vmatprep.subr.mxu0 0.0
  %2004 = vmatpush1.msra.mxu0 %v1075
  %2005 = vmatprep.subr.mxu0 0.0
  %2006 = vmatpush1.msra.mxu0 %v1076
  %2007 = vmatprep.subr.mxu0 0.0
  %2008 = vmatpush1.msra.mxu0 %v1077
  %2009 = vmatprep.subr.mxu0 0.0
  %2010 = vmatpush1.msra.mxu0 %v1078
  %2011 = vmatprep.subr.mxu0 0.0
  %2012 = vmatpush1.msra.mxu0 %v1079
  %2013 = vmatprep.subr.mxu0 0.0
  %2014 = vmatpush1.msra.mxu0 %v1080
  %2015 = vmatprep.subr.mxu0 0.0
  %2016 = vmatpush1.msra.mxu0 %v1081
  %2017 = vmatprep.subr.mxu0 0.0
  %2018 = vmatpush1.msra.mxu0 %v1082
  %2019 = vmatprep.subr.mxu0 0.0
  %2020 = vmatpush1.msra.mxu0 %v1083
  %2021 = vmatprep.subr.mxu0 0.0
  %2022 = vmatpush1.msra.mxu0 %v1084
  %2023 = vmatprep.subr.mxu0 0.0
  %2024 = vmatpush1.msra.mxu0 %v1085
  %2025 = vmatprep.subr.mxu0 0.0
  %2026 = vmatpush1.msra.mxu0 %v1086
  %2027 = vmatprep.subr.mxu0 0.0
  %2028 = vmatpush1.msra.mxu0 %v1087
  %2029 = vmatprep.subr.mxu0 0.0
  %2030 = vmatpush1.msra.mxu0 %v1088
  %2031 = vmatprep.subr.mxu0 0.0
  %2032 = vmatpush1.msra.mxu0 %v1089
  %2033 = vmatprep.subr.mxu0 0.0
  %2034 = vmatpush1.msra.mxu0 %v1090
  %2035 = vmatprep.subr.mxu0 0.0
  %2036 = vmatpush1.msra.mxu0 %v1091
  %2037 = vmatprep.subr.mxu0 0.0
  %2038 = vmatpush1.msra.mxu0 %v1092
  %2039 = vmatprep.subr.mxu0 0.0
  %2040 = vmatpush1.msra.mxu0 %v1093
  %2041 = vmatprep.subr.mxu0 0.0
  %2042 = vmatpush1.msra.mxu0 %v1094
  %2043 = vmatprep.mubr.f32.mxu0 %v532
  %2044 = vmatmul.mubr.f32.gmra.mrb[0].mxu0 %v531
  %v2045 = vpop.f32.mrb[0].mxu0
  %v2046 = vadd.f32 %v1811, %v2045
  %v2047 = vpop.f32.mrb[0].mxu0
  %2048 = vmatprep.mubr.f32.mxu0 %v545
  %2049 = vmatmul.mubr.f32.gmra.mrb[0].mxu0 %v544
  %v2050 = vpop.f32.mrb[0].mxu0
  %v2051 = vadd.f32 %v1816, %v2050
  %v2052 = vpop.f32.mrb[0].mxu0
  %2053 = vmatprep.mubr.f32.mxu0 %v558
  %2054 = vmatmul.mubr.f32.gmra.mrb[0].mxu0 %v557
  %v2055 = vpop.f32.mrb[0].mxu0
  %v2056 = vadd.f32 %v1821, %v2055
  %v2057 = vpop.f32.mrb[0].mxu0
  %2058 = vmatprep.mubr.f32.mxu0 %v571
  %2059 = vmatmul.mubr.f32.gmra.mrb[0].mxu0 %v570
  %v2060 = vpop.f32.mrb[0].mxu0
  %v2061 = vadd.f32 %v1826, %v2060
  %v2062 = vpop.f32.mrb[0].mxu0
  %2063 = vmatprep.mubr.f32.mxu0 %v584
  %2064 = vmatmul.mubr.f32.gmra.mrb[0].mxu0 %v583
  %v2065 = vpop.f32.mrb[0].mxu0
  %v2066 = vadd.f32 %v1831, %v2065
  %v2067 = vpop.f32.mrb[0].mxu0
  %2068 = vmatprep.mubr.f32.mxu0 %v597
  %2069 = vmatmul.mubr.f32.gmra.mrb[0].mxu0 %v596
  %v2070 = vpop.f32.mrb[0].mxu0
  %v2071 = vadd.f32 %v1836, %v2070
  %v2072 = vpop.f32.mrb[0].mxu0
  %2073 = vmatprep.mubr.f32.mxu0 %v610
  %2074 = vmatmul.mubr.f32.gmra.mrb[0].mxu0 %v609
  %v2075 = vpop.f32.mrb[0].mxu0
  %v2076 = vadd.f32 %v1841, %v2075
  %v2077 = vpop.f32.mrb[0].mxu0
  %2078 = vmatprep.mubr.f32.mxu0 %v623
  %2079 = vmatmul.mubr.f32.gmra.mrb[0].mxu0 %v622
  %v2080 = vpop.f32.mrb[0].mxu0
  %v2081 = vadd.f32 %v1846, %v2080
  %v2082 = vpop.f32.mrb[0].mxu0
  %2083 = vmatprep.mubr.f32.mxu0 %v636
  %2084 = vmatmul.mubr.f32.gmra.mrb[0].mxu0 %v635
  %v2085 = vpop.f32.mrb[0].mxu0
  %v2086 = vadd.f32 %v1851, %v2085
  %v2087 = vpop.f32.mrb[0].mxu0
  %2088 = vmatprep.mubr.f32.mxu0 %v649
  %2089 = vmatmul.mubr.f32.gmra.mrb[0].mxu0 %v648
  %v2090 = vpop.f32.mrb[0].mxu0
  %v2091 = vadd.f32 %v1856, %v2090
  %v2092 = vpop.f32.mrb[0].mxu0
  %2093 = vmatprep.mubr.f32.mxu0 %v662
  %2094 = vmatmul.mubr.f32.gmra.mrb[0].mxu0 %v661
  %v2095 = vpop.f32.mrb[0].mxu0
  %v2096 = vadd.f32 %v1861, %v2095
  %v2097 = vpop.f32.mrb[0].mxu0
  %2098 = vmatprep.mubr.f32.mxu0 %v675
  %2099 = vmatmul.mubr.f32.gmra.mrb[0].mxu0 %v674
  %v2100 = vpop.f32.mrb[0].mxu0
  %v2101 = vadd.f32 %v1866, %v2100
  %v2102 = vpop.f32.mrb[0].mxu0
  %2103 = vmatprep.mubr.f32.mxu0 %v688
  %2104 = vmatmul.mubr.f32.gmra.mrb[0].mxu0 %v687
  %v2105 = vpop.f32.mrb[0].mxu0
  %v2106 = vadd.f32 %v1871, %v2105
  %v2107 = vpop.f32.mrb[0].mxu0
  %2108 = vmatprep.mubr.f32.mxu0 %v701
  %2109 = vmatmul.mubr.f32.gmra.mrb[0].mxu0 %v700
  %v2110 = vpop.f32.mrb[0].mxu0
  %v2111 = vadd.f32 %v1876, %v2110
  %v2112 = vpop.f32.mrb[0].mxu0
  %2113 = vmatprep.mubr.f32.mxu0 %v714
  %2114 = vmatmul.mubr.f32.gmra.mrb[0].mxu0 %v713
  %v2115 = vpop.f32.mrb[0].mxu0
  %v2116 = vadd.f32 %v1881, %v2115
  %v2117 = vpop.f32.mrb[0].mxu0
  %2118 = vmatprep.mubr.f32.mxu0 %v727
  %2119 = vmatmul.mubr.f32.gmra.mrb[0].mxu0 %v726
  %v2120 = vpop.f32.mrb[0].mxu0
  %v2121 = vadd.f32 %v1886, %v2120
  %v2122 = vpop.f32.mrb[0].mxu0
  %2123 = vmatprep.mubr.f32.mxu0 %v740
  %2124 = vmatmul.mubr.f32.gmra.mrb[0].mxu0 %v739
  %v2125 = vpop.f32.mrb[0].mxu0
  %v2126 = vadd.f32 %v1891, %v2125
  %v2127 = vpop.f32.mrb[0].mxu0
  %2128 = vmatprep.mubr.f32.mxu0 %v753
  %2129 = vmatmul.mubr.f32.gmra.mrb[0].mxu0 %v752
  %v2130 = vpop.f32.mrb[0].mxu0
  %v2131 = vadd.f32 %v1896, %v2130
  %v2132 = vpop.f32.mrb[0].mxu0
  %2133 = vmatprep.mubr.f32.mxu0 %v766
  %2134 = vmatmul.mubr.f32.gmra.mrb[0].mxu0 %v765
  %v2135 = vpop.f32.mrb[0].mxu0
  %v2136 = vadd.f32 %v1901, %v2135
  %v2137 = vpop.f32.mrb[0].mxu0
  %2138 = vmatprep.mubr.f32.mxu0 %v779
  %2139 = vmatmul.mubr.f32.gmra.mrb[0].mxu0 %v778
  %v2140 = vpop.f32.mrb[0].mxu0
  %v2141 = vadd.f32 %v1906, %v2140
  %v2142 = vpop.f32.mrb[0].mxu0
  %2143 = vmatprep.mubr.f32.mxu0 %v792
  %2144 = vmatmul.mubr.f32.gmra.mrb[0].mxu0 %v791
  %v2145 = vpop.f32.mrb[0].mxu0
  %v2146 = vadd.f32 %v1911, %v2145
  %v2147 = vpop.f32.mrb[0].mxu0
  %2148 = vmatprep.mubr.f32.mxu0 %v805
  %2149 = vmatmul.mubr.f32.gmra.mrb[0].mxu0 %v804
  %v2150 = vpop.f32.mrb[0].mxu0
  %v2151 = vadd.f32 %v1916, %v2150
  %v2152 = vpop.f32.mrb[0].mxu0
  %2153 = vmatprep.mubr.f32.mxu0 %v818
  %2154 = vmatmul.mubr.f32.gmra.mrb[0].mxu0 %v817
  %v2155 = vpop.f32.mrb[0].mxu0
  %v2156 = vadd.f32 %v1921, %v2155
  %v2157 = vpop.f32.mrb[0].mxu0
  %2158 = vmatprep.mubr.f32.mxu0 %v831
  %2159 = vmatmul.mubr.f32.gmra.mrb[0].mxu0 %v830
  %v2160 = vpop.f32.mrb[0].mxu0
  %v2161 = vadd.f32 %v1926, %v2160
  %v2162 = vpop.f32.mrb[0].mxu0
  %2163 = vmatprep.mubr.f32.mxu0 %v844
  %2164 = vmatmul.mubr.f32.gmra.mrb[0].mxu0 %v843
  %v2165 = vpop.f32.mrb[0].mxu0
  %v2166 = vadd.f32 %v1931, %v2165
  %v2167 = vpop.f32.mrb[0].mxu0
  %2168 = vmatprep.mubr.f32.mxu0 %v857
  %2169 = vmatmul.mubr.f32.gmra.mrb[0].mxu0 %v856
  %v2170 = vpop.f32.mrb[0].mxu0
  %v2171 = vadd.f32 %v1936, %v2170
  %v2172 = vpop.f32.mrb[0].mxu0
  %2173 = vmatprep.mubr.f32.mxu0 %v870
  %2174 = vmatmul.mubr.f32.gmra.mrb[0].mxu0 %v869
  %v2175 = vpop.f32.mrb[0].mxu0
  %v2176 = vadd.f32 %v1941, %v2175
  %v2177 = vpop.f32.mrb[0].mxu0
  %2178 = vmatprep.mubr.f32.mxu0 %v883
  %2179 = vmatmul.mubr.f32.gmra.mrb[0].mxu0 %v882
  %v2180 = vpop.f32.mrb[0].mxu0
  %v2181 = vadd.f32 %v1946, %v2180
  %v2182 = vpop.f32.mrb[0].mxu0
  %2183 = vmatprep.mubr.f32.mxu0 %v896
  %2184 = vmatmul.mubr.f32.gmra.mrb[0].mxu0 %v895
  %v2185 = vpop.f32.mrb[0].mxu0
  %v2186 = vadd.f32 %v1951, %v2185
  %v2187 = vpop.f32.mrb[0].mxu0
  %2188 = vmatprep.mubr.f32.mxu0 %v909
  %2189 = vmatmul.mubr.f32.gmra.mrb[0].mxu0 %v908
  %v2190 = vpop.f32.mrb[0].mxu0
  %v2191 = vadd.f32 %v1956, %v2190
  %v2192 = vpop.f32.mrb[0].mxu0
  %2193 = vmatprep.mubr.f32.mxu0 %v922
  %2194 = vmatmul.mubr.f32.gmra.mrb[0].mxu0 %v921
  %v2195 = vpop.f32.mrb[0].mxu0
  %v2196 = vadd.f32 %v1961, %v2195
  %v2197 = vpop.f32.mrb[0].mxu0
  %2198 = vmatprep.mubr.f32.mxu0 %v935
  %2199 = vmatmul.mubr.f32.gmra.mrb[0].mxu0 %v934
  %v2200 = vpop.f32.mrb[0].mxu0
  %v2201 = vadd.f32 %v1966, %v2200
  %v2202 = vpop.f32.mrb[0].mxu0
  %2203 = vmatprep.mubr.f32.mxu0 %v948
  %2204 = vmatmul.mubr.f32.gmra.mrb[0].mxu0 %v947
  %v2205 = vpop.f32.mrb[0].mxu0
  %v2206 = vadd.f32 %v1971, %v2205
  %v2207 = vpop.f32.mrb[0].mxu0
  %2208 = vmatprep.mubr.f32.mxu0 %v961
  %2209 = vmatmul.mubr.f32.gmra.mrb[0].mxu0 %v960
  %v2210 = vpop.f32.mrb[0].mxu0
  %v2211 = vadd.f32 %v1976, %v2210
  %v2212 = vpop.f32.mrb[0].mxu0
  %2213 = vdwg.mxu0
  %2214 = vmatprep.subr.mxu0 0.0
  %2215 = vmatpush1.msra.mxu0 %v1095
  %2216 = vmatprep.subr.mxu0 0.0
  %2217 = vmatpush1.msra.mxu0 %v1096
  %2218 = vmatprep.subr.mxu0 0.0
  %2219 = vmatpush1.msra.mxu0 %v1097
  %2220 = vmatprep.subr.mxu0 0.0
  %2221 = vmatpush1.msra.mxu0 %v1098
  %2222 = vmatprep.subr.mxu0 0.0
  %2223 = vmatpush1.msra.mxu0 %v1099
  %2224 = vmatprep.subr.mxu0 0.0
  %2225 = vmatpush1.msra.mxu0 %v1100
  %2226 = vmatprep.subr.mxu0 0.0
  %2227 = vmatpush1.msra.mxu0 %v1101
  %2228 = vmatprep.subr.mxu0 0.0
  %2229 = vmatpush1.msra.mxu0 %v1102
  %2230 = vmatprep.subr.mxu0 0.0
  %2231 = vmatpush1.msra.mxu0 %v1103
  %2232 = vmatprep.subr.mxu0 0.0
  %2233 = vmatpush1.msra.mxu0 %v1104
  %2234 = vmatprep.subr.mxu0 0.0
  %2235 = vmatpush1.msra.mxu0 %v1105
  %2236 = vmatprep.subr.mxu0 0.0
  %2237 = vmatpush1.msra.mxu0 %v1106
  %2238 = vmatprep.subr.mxu0 0.0
  %2239 = vmatpush1.msra.mxu0 %v1107
  %2240 = vmatprep.subr.mxu0 0.0
  %2241 = vmatpush1.msra.mxu0 %v1108
  %2242 = vmatprep.subr.mxu0 0.0
  %2243 = vmatpush1.msra.mxu0 %v1109
  %2244 = vmatprep.subr.mxu0 0.0
  %2245 = vmatpush1.msra.mxu0 %v1110
  %2246 = vmatprep.subr.mxu0 0.0
  %2247 = vmatpush1.msra.mxu0 %v1111
  %2248 = vmatprep.subr.mxu0 0.0
  %2249 = vmatpush1.msra.mxu0 %v1112
  %2250 = vmatprep.subr.mxu0 0.0
  %2251 = vmatpush1.msra.mxu0 %v1113
  %2252 = vmatprep.subr.mxu0 0.0
  %2253 = vmatpush1.msra.mxu0 %v1114
  %2254 = vmatprep.subr.mxu0 0.0
  %2255 = vmatpush1.msra.mxu0 %v1115
  %2256 = vmatprep.subr.mxu0 0.0
  %2257 = vmatpush1.msra.mxu0 %v1116
  %2258 = vmatprep.subr.mxu0 0.0
  %2259 = vmatpush1.msra.mxu0 %v1117
  %2260 = vmatprep.subr.mxu0 0.0
  %2261 = vmatpush1.msra.mxu0 %v1118
  %2262 = vmatprep.subr.mxu0 0.0
  %2263 = vmatpush1.msra.mxu0 %v1119
  %2264 = vmatprep.subr.mxu0 0.0
  %2265 = vmatpush1.msra.mxu0 %v1120
  %2266 = vmatprep.subr.mxu0 0.0
  %2267 = vmatpush1.msra.mxu0 %v1121
  %2268 = vmatprep.subr.mxu0 0.0
  %2269 = vmatpush1.msra.mxu0 %v1122
  %2270 = vmatprep.subr.mxu0 0.0
  %2271 = vmatpush1.msra.mxu0 %v1123
  %2272 = vmatprep.subr.mxu0 0.0
  %2273 = vmatpush1.msra.mxu0 %v1124
  %2274 = vmatprep.subr.mxu0 0.0
  %2275 = vmatpush1.msra.mxu0 %v1125
  %2276 = vmatprep.subr.mxu0 0.0
  %2277 = vmatpush1.msra.mxu0 %v1126
  %2278 = vmatprep.mubr.f32.mxu0 %v534
  %2279 = vmatmul.mubr.f32.gmra.mrb[0].mxu0 %v533
  %v2280 = vpop.f32.mrb[0].mxu0
  %v2281 = vadd.f32 %v2046, %v2280
  %v2282 = vpop.f32.mrb[0].mxu0
  %2283 = vmatprep.mubr.f32.mxu0 %v547
  %2284 = vmatmul.mubr.f32.gmra.mrb[0].mxu0 %v546
  %v2285 = vpop.f32.mrb[0].mxu0
  %v2286 = vadd.f32 %v2051, %v2285
  %v2287 = vpop.f32.mrb[0].mxu0
  %2288 = vmatprep.mubr.f32.mxu0 %v560
  %2289 = vmatmul.mubr.f32.gmra.mrb[0].mxu0 %v559
  %v2290 = vpop.f32.mrb[0].mxu0
  %v2291 = vadd.f32 %v2056, %v2290
  %v2292 = vpop.f32.mrb[0].mxu0
  %2293 = vmatprep.mubr.f32.mxu0 %v573
  %2294 = vmatmul.mubr.f32.gmra.mrb[0].mxu0 %v572
  %v2295 = vpop.f32.mrb[0].mxu0
  %v2296 = vadd.f32 %v2061, %v2295
  %v2297 = vpop.f32.mrb[0].mxu0
  %2298 = vmatprep.mubr.f32.mxu0 %v586
  %2299 = vmatmul.mubr.f32.gmra.mrb[0].mxu0 %v585
  %v2300 = vpop.f32.mrb[0].mxu0
  %v2301 = vadd.f32 %v2066, %v2300
  %v2302 = vpop.f32.mrb[0].mxu0
  %2303 = vmatprep.mubr.f32.mxu0 %v599
  %2304 = vmatmul.mubr.f32.gmra.mrb[0].mxu0 %v598
  %v2305 = vpop.f32.mrb[0].mxu0
  %v2306 = vadd.f32 %v2071, %v2305
  %v2307 = vpop.f32.mrb[0].mxu0
  %2308 = vmatprep.mubr.f32.mxu0 %v612
  %2309 = vmatmul.mubr.f32.gmra.mrb[0].mxu0 %v611
  %v2310 = vpop.f32.mrb[0].mxu0
  %v2311 = vadd.f32 %v2076, %v2310
  %v2312 = vpop.f32.mrb[0].mxu0
  %2313 = vmatprep.mubr.f32.mxu0 %v625
  %2314 = vmatmul.mubr.f32.gmra.mrb[0].mxu0 %v624
  %v2315 = vpop.f32.mrb[0].mxu0
  %v2316 = vadd.f32 %v2081, %v2315
  %v2317 = vpop.f32.mrb[0].mxu0
  %2318 = vmatprep.mubr.f32.mxu0 %v638
  %2319 = vmatmul.mubr.f32.gmra.mrb[0].mxu0 %v637
  %v2320 = vpop.f32.mrb[0].mxu0
  %v2321 = vadd.f32 %v2086, %v2320
  %v2322 = vpop.f32.mrb[0].mxu0
  %2323 = vmatprep.mubr.f32.mxu0 %v651
  %2324 = vmatmul.mubr.f32.gmra.mrb[0].mxu0 %v650
  %v2325 = vpop.f32.mrb[0].mxu0
  %v2326 = vadd.f32 %v2091, %v2325
  %v2327 = vpop.f32.mrb[0].mxu0
  %2328 = vmatprep.mubr.f32.mxu0 %v664
  %2329 = vmatmul.mubr.f32.gmra.mrb[0].mxu0 %v663
  %v2330 = vpop.f32.mrb[0].mxu0
  %v2331 = vadd.f32 %v2096, %v2330
  %v2332 = vpop.f32.mrb[0].mxu0
  %2333 = vmatprep.mubr.f32.mxu0 %v677
  %2334 = vmatmul.mubr.f32.gmra.mrb[0].mxu0 %v676
  %v2335 = vpop.f32.mrb[0].mxu0
  %v2336 = vadd.f32 %v2101, %v2335
  %v2337 = vpop.f32.mrb[0].mxu0
  %2338 = vmatprep.mubr.f32.mxu0 %v690
  %2339 = vmatmul.mubr.f32.gmra.mrb[0].mxu0 %v689
  %v2340 = vpop.f32.mrb[0].mxu0
  %v2341 = vadd.f32 %v2106, %v2340
  %v2342 = vpop.f32.mrb[0].mxu0
  %2343 = vmatprep.mubr.f32.mxu0 %v703
  %2344 = vmatmul.mubr.f32.gmra.mrb[0].mxu0 %v702
  %v2345 = vpop.f32.mrb[0].mxu0
  %v2346 = vadd.f32 %v2111, %v2345
  %v2347 = vpop.f32.mrb[0].mxu0
  %2348 = vmatprep.mubr.f32.mxu0 %v716
  %2349 = vmatmul.mubr.f32.gmra.mrb[0].mxu0 %v715
  %v2350 = vpop.f32.mrb[0].mxu0
  %v2351 = vadd.f32 %v2116, %v2350
  %v2352 = vpop.f32.mrb[0].mxu0
  %2353 = vmatprep.mubr.f32.mxu0 %v729
  %2354 = vmatmul.mubr.f32.gmra.mrb[0].mxu0 %v728
  %v2355 = vpop.f32.mrb[0].mxu0
  %v2356 = vadd.f32 %v2121, %v2355
  %v2357 = vpop.f32.mrb[0].mxu0
  %2358 = vmatprep.mubr.f32.mxu0 %v742
  %2359 = vmatmul.mubr.f32.gmra.mrb[0].mxu0 %v741
  %v2360 = vpop.f32.mrb[0].mxu0
  %v2361 = vadd.f32 %v2126, %v2360
  %v2362 = vpop.f32.mrb[0].mxu0
  %2363 = vmatprep.mubr.f32.mxu0 %v755
  %2364 = vmatmul.mubr.f32.gmra.mrb[0].mxu0 %v754
  %v2365 = vpop.f32.mrb[0].mxu0
  %v2366 = vadd.f32 %v2131, %v2365
  %v2367 = vpop.f32.mrb[0].mxu0
  %2368 = vmatprep.mubr.f32.mxu0 %v768
  %2369 = vmatmul.mubr.f32.gmra.mrb[0].mxu0 %v767
  %v2370 = vpop.f32.mrb[0].mxu0
  %v2371 = vadd.f32 %v2136, %v2370
  %v2372 = vpop.f32.mrb[0].mxu0
  %2373 = vmatprep.mubr.f32.mxu0 %v781
  %2374 = vmatmul.mubr.f32.gmra.mrb[0].mxu0 %v780
  %v2375 = vpop.f32.mrb[0].mxu0
  %v2376 = vadd.f32 %v2141, %v2375
  %v2377 = vpop.f32.mrb[0].mxu0
  %2378 = vmatprep.mubr.f32.mxu0 %v794
  %2379 = vmatmul.mubr.f32.gmra.mrb[0].mxu0 %v793
  %v2380 = vpop.f32.mrb[0].mxu0
  %v2381 = vadd.f32 %v2146, %v2380
  %v2382 = vpop.f32.mrb[0].mxu0
  %2383 = vmatprep.mubr.f32.mxu0 %v807
  %2384 = vmatmul.mubr.f32.gmra.mrb[0].mxu0 %v806
  %v2385 = vpop.f32.mrb[0].mxu0
  %v2386 = vadd.f32 %v2151, %v2385
  %v2387 = vpop.f32.mrb[0].mxu0
  %2388 = vmatprep.mubr.f32.mxu0 %v820
  %2389 = vmatmul.mubr.f32.gmra.mrb[0].mxu0 %v819
  %v2390 = vpop.f32.mrb[0].mxu0
  %v2391 = vadd.f32 %v2156, %v2390
  %v2392 = vpop.f32.mrb[0].mxu0
  %2393 = vmatprep.mubr.f32.mxu0 %v833
  %2394 = vmatmul.mubr.f32.gmra.mrb[0].mxu0 %v832
  %v2395 = vpop.f32.mrb[0].mxu0
  %v2396 = vadd.f32 %v2161, %v2395
  %v2397 = vpop.f32.mrb[0].mxu0
  %2398 = vmatprep.mubr.f32.mxu0 %v846
  %2399 = vmatmul.mubr.f32.gmra.mrb[0].mxu0 %v845
  %v2400 = vpop.f32.mrb[0].mxu0
  %v2401 = vadd.f32 %v2166, %v2400
  %v2402 = vpop.f32.mrb[0].mxu0
  %2403 = vmatprep.mubr.f32.mxu0 %v859
  %2404 = vmatmul.mubr.f32.gmra.mrb[0].mxu0 %v858
  %v2405 = vpop.f32.mrb[0].mxu0
  %v2406 = vadd.f32 %v2171, %v2405
  %v2407 = vpop.f32.mrb[0].mxu0
  %2408 = vmatprep.mubr.f32.mxu0 %v872
  %2409 = vmatmul.mubr.f32.gmra.mrb[0].mxu0 %v871
  %v2410 = vpop.f32.mrb[0].mxu0
  %v2411 = vadd.f32 %v2176, %v2410
  %v2412 = vpop.f32.mrb[0].mxu0
  %2413 = vmatprep.mubr.f32.mxu0 %v885
  %2414 = vmatmul.mubr.f32.gmra.mrb[0].mxu0 %v884
  %v2415 = vpop.f32.mrb[0].mxu0
  %v2416 = vadd.f32 %v2181, %v2415
  %v2417 = vpop.f32.mrb[0].mxu0
  %2418 = vmatprep.mubr.f32.mxu0 %v898
  %2419 = vmatmul.mubr.f32.gmra.mrb[0].mxu0 %v897
  %v2420 = vpop.f32.mrb[0].mxu0
  %v2421 = vadd.f32 %v2186, %v2420
  %v2422 = vpop.f32.mrb[0].mxu0
  %2423 = vmatprep.mubr.f32.mxu0 %v911
  %2424 = vmatmul.mubr.f32.gmra.mrb[0].mxu0 %v910
  %v2425 = vpop.f32.mrb[0].mxu0
  %v2426 = vadd.f32 %v2191, %v2425
  %v2427 = vpop.f32.mrb[0].mxu0
  %2428 = vmatprep.mubr.f32.mxu0 %v924
  %2429 = vmatmul.mubr.f32.gmra.mrb[0].mxu0 %v923
  %v2430 = vpop.f32.mrb[0].mxu0
  %v2431 = vadd.f32 %v2196, %v2430
  %v2432 = vpop.f32.mrb[0].mxu0
  %2433 = vmatprep.mubr.f32.mxu0 %v937
  %2434 = vmatmul.mubr.f32.gmra.mrb[0].mxu0 %v936
  %v2435 = vpop.f32.mrb[0].mxu0
  %v2436 = vadd.f32 %v2201, %v2435
  %v2437 = vpop.f32.mrb[0].mxu0
  %2438 = vmatprep.mubr.f32.mxu0 %v950
  %2439 = vmatmul.mubr.f32.gmra.mrb[0].mxu0 %v949
  %v2440 = vpop.f32.mrb[0].mxu0
  %v2441 = vadd.f32 %v2206, %v2440
  %v2442 = vpop.f32.mrb[0].mxu0
  %2443 = vmatprep.mubr.f32.mxu0 %v963
  %2444 = vmatmul.mubr.f32.gmra.mrb[0].mxu0 %v962
  %v2445 = vpop.f32.mrb[0].mxu0
  %v2446 = vadd.f32 %v2211, %v2445
  %v2447 = vpop.f32.mrb[0].mxu0
  %2448 = vdwg.mxu0
  %2449 = vmatprep.subr.mxu0 0.0
  %2450 = vmatpush1.msra.mxu0 %v1127
  %2451 = vmatprep.subr.mxu0 0.0
  %2452 = vmatpush1.msra.mxu0 %v1128
  %2453 = vmatprep.subr.mxu0 0.0
  %2454 = vmatpush1.msra.mxu0 %v1129
  %2455 = vmatprep.subr.mxu0 0.0
  %2456 = vmatpush1.msra.mxu0 %v1130
  %2457 = vmatprep.subr.mxu0 0.0
  %2458 = vmatpush1.msra.mxu0 %v1131
  %2459 = vmatprep.subr.mxu0 0.0
  %2460 = vmatpush1.msra.mxu0 %v1132
  %2461 = vmatprep.subr.mxu0 0.0
  %2462 = vmatpush1.msra.mxu0 %v1133
  %2463 = vmatprep.subr.mxu0 0.0
  %2464 = vmatpush1.msra.mxu0 %v1134
  %2465 = vmatprep.subr.mxu0 0.0
  %2466 = vmatpush1.msra.mxu0 %v1135
  %2467 = vmatprep.subr.mxu0 0.0
  %2468 = vmatpush1.msra.mxu0 %v1136
  %2469 = vmatprep.subr.mxu0 0.0
  %2470 = vmatpush1.msra.mxu0 %v1137
  %2471 = vmatprep.subr.mxu0 0.0
  %2472 = vmatpush1.msra.mxu0 %v1138
  %2473 = vmatprep.subr.mxu0 0.0
  %2474 = vmatpush1.msra.mxu0 %v1139
  %2475 = vmatprep.subr.mxu0 0.0
  %2476 = vmatpush1.msra.mxu0 %v1140
  %2477 = vmatprep.subr.mxu0 0.0
  %2478 = vmatpush1.msra.mxu0 %v1141
  %2479 = vmatprep.subr.mxu0 0.0
  %2480 = vmatpush1.msra.mxu0 %v1142
  %2481 = vmatprep.subr.mxu0 0.0
  %2482 = vmatpush1.msra.mxu0 %v1143
  %2483 = vmatprep.subr.mxu0 0.0
  %2484 = vmatpush1.msra.mxu0 %v1144
  %2485 = vmatprep.subr.mxu0 0.0
  %2486 = vmatpush1.msra.mxu0 %v1145
  %2487 = vmatprep.subr.mxu0 0.0
  %2488 = vmatpush1.msra.mxu0 %v1146
  %2489 = vmatprep.subr.mxu0 0.0
  %2490 = vmatpush1.msra.mxu0 %v1147
  %2491 = vmatprep.subr.mxu0 0.0
  %2492 = vmatpush1.msra.mxu0 %v1148
  %2493 = vmatprep.subr.mxu0 0.0
  %2494 = vmatpush1.msra.mxu0 %v1149
  %2495 = vmatprep.subr.mxu0 0.0
  %2496 = vmatpush1.msra.mxu0 %v1150
  %2497 = vmatprep.subr.mxu0 0.0
  %2498 = vmatpush1.msra.mxu0 %v1151
  %2499 = vmatprep.subr.mxu0 0.0
  %2500 = vmatpush1.msra.mxu0 %v1152
  %2501 = vmatprep.subr.mxu0 0.0
  %2502 = vmatpush1.msra.mxu0 %v1153
  %2503 = vmatprep.subr.mxu0 0.0
  %2504 = vmatpush1.msra.mxu0 %v1154
  %2505 = vmatprep.subr.mxu0 0.0
  %2506 = vmatpush1.msra.mxu0 %v1155
  %2507 = vmatprep.subr.mxu0 0.0
  %2508 = vmatpush1.msra.mxu0 %v1156
  %2509 = vmatprep.subr.mxu0 0.0
  %2510 = vmatpush1.msra.mxu0 %v1157
  %2511 = vmatprep.subr.mxu0 0.0
  %2512 = vmatpush1.msra.mxu0 %v1158
  %2513 = vmatprep.mubr.f32.mxu0 %v536
  %2514 = vmatmul.mubr.f32.gmra.mrb[0].mxu0 %v535
  %v2515 = vpop.f32.mrb[0].mxu0
  %v2516 = vadd.f32 %v2281, %v2515
  %v2517 = vpop.f32.mrb[0].mxu0
  %2518 = vmatprep.mubr.f32.mxu0 %v549
  %2519 = vmatmul.mubr.f32.gmra.mrb[0].mxu0 %v548
  %v2520 = vpop.f32.mrb[0].mxu0
  %v2521 = vadd.f32 %v2286, %v2520
  %v2522 = vpop.f32.mrb[0].mxu0
  %2523 = vmatprep.mubr.f32.mxu0 %v562
  %2524 = vmatmul.mubr.f32.gmra.mrb[0].mxu0 %v561
  %v2525 = vpop.f32.mrb[0].mxu0
  %v2526 = vadd.f32 %v2291, %v2525
  %v2527 = vpop.f32.mrb[0].mxu0
  %2528 = vmatprep.mubr.f32.mxu0 %v575
  %2529 = vmatmul.mubr.f32.gmra.mrb[0].mxu0 %v574
  %v2530 = vpop.f32.mrb[0].mxu0
  %v2531 = vadd.f32 %v2296, %v2530
  %v2532 = vpop.f32.mrb[0].mxu0
  %2533 = vmatprep.mubr.f32.mxu0 %v588
  %2534 = vmatmul.mubr.f32.gmra.mrb[0].mxu0 %v587
  %v2535 = vpop.f32.mrb[0].mxu0
  %v2536 = vadd.f32 %v2301, %v2535
  %v2537 = vpop.f32.mrb[0].mxu0
  %2538 = vmatprep.mubr.f32.mxu0 %v601
  %2539 = vmatmul.mubr.f32.gmra.mrb[0].mxu0 %v600
  %v2540 = vpop.f32.mrb[0].mxu0
  %v2541 = vadd.f32 %v2306, %v2540
  %v2542 = vpop.f32.mrb[0].mxu0
  %2543 = vmatprep.mubr.f32.mxu0 %v614
  %2544 = vmatmul.mubr.f32.gmra.mrb[0].mxu0 %v613
  %v2545 = vpop.f32.mrb[0].mxu0
  %v2546 = vadd.f32 %v2311, %v2545
  %v2547 = vpop.f32.mrb[0].mxu0
  %2548 = vmatprep.mubr.f32.mxu0 %v627
  %2549 = vmatmul.mubr.f32.gmra.mrb[0].mxu0 %v626
  %v2550 = vpop.f32.mrb[0].mxu0
  %v2551 = vadd.f32 %v2316, %v2550
  %v2552 = vpop.f32.mrb[0].mxu0
  %2553 = vmatprep.mubr.f32.mxu0 %v640
  %2554 = vmatmul.mubr.f32.gmra.mrb[0].mxu0 %v639
  %v2555 = vpop.f32.mrb[0].mxu0
  %v2556 = vadd.f32 %v2321, %v2555
  %v2557 = vpop.f32.mrb[0].mxu0
  %2558 = vmatprep.mubr.f32.mxu0 %v653
  %2559 = vmatmul.mubr.f32.gmra.mrb[0].mxu0 %v652
  %v2560 = vpop.f32.mrb[0].mxu0
  %v2561 = vadd.f32 %v2326, %v2560
  %v2562 = vpop.f32.mrb[0].mxu0
  %2563 = vmatprep.mubr.f32.mxu0 %v666
  %2564 = vmatmul.mubr.f32.gmra.mrb[0].mxu0 %v665
  %v2565 = vpop.f32.mrb[0].mxu0
  %v2566 = vadd.f32 %v2331, %v2565
  %v2567 = vpop.f32.mrb[0].mxu0
  %2568 = vmatprep.mubr.f32.mxu0 %v679
  %2569 = vmatmul.mubr.f32.gmra.mrb[0].mxu0 %v678
  %v2570 = vpop.f32.mrb[0].mxu0
  %v2571 = vadd.f32 %v2336, %v2570
  %v2572 = vpop.f32.mrb[0].mxu0
  %2573 = vmatprep.mubr.f32.mxu0 %v692
  %2574 = vmatmul.mubr.f32.gmra.mrb[0].mxu0 %v691
  %v2575 = vpop.f32.mrb[0].mxu0
  %v2576 = vadd.f32 %v2341, %v2575
  %v2577 = vpop.f32.mrb[0].mxu0
  %2578 = vmatprep.mubr.f32.mxu0 %v705
  %2579 = vmatmul.mubr.f32.gmra.mrb[0].mxu0 %v704
  %v2580 = vpop.f32.mrb[0].mxu0
  %v2581 = vadd.f32 %v2346, %v2580
  %v2582 = vpop.f32.mrb[0].mxu0
  %2583 = vmatprep.mubr.f32.mxu0 %v718
  %2584 = vmatmul.mubr.f32.gmra.mrb[0].mxu0 %v717
  %v2585 = vpop.f32.mrb[0].mxu0
  %v2586 = vadd.f32 %v2351, %v2585
  %v2587 = vpop.f32.mrb[0].mxu0
  %2588 = vmatprep.mubr.f32.mxu0 %v731
  %2589 = vmatmul.mubr.f32.gmra.mrb[0].mxu0 %v730
  %v2590 = vpop.f32.mrb[0].mxu0
  %v2591 = vadd.f32 %v2356, %v2590
  %v2592 = vpop.f32.mrb[0].mxu0
  %2593 = vmatprep.mubr.f32.mxu0 %v744
  %2594 = vmatmul.mubr.f32.gmra.mrb[0].mxu0 %v743
  %v2595 = vpop.f32.mrb[0].mxu0
  %v2596 = vadd.f32 %v2361, %v2595
  %v2597 = vpop.f32.mrb[0].mxu0
  %2598 = vmatprep.mubr.f32.mxu0 %v757
  %2599 = vmatmul.mubr.f32.gmra.mrb[0].mxu0 %v756
  %v2600 = vpop.f32.mrb[0].mxu0
  %v2601 = vadd.f32 %v2366, %v2600
  %v2602 = vpop.f32.mrb[0].mxu0
  %2603 = vmatprep.mubr.f32.mxu0 %v770
  %2604 = vmatmul.mubr.f32.gmra.mrb[0].mxu0 %v769
  %v2605 = vpop.f32.mrb[0].mxu0
  %v2606 = vadd.f32 %v2371, %v2605
  %v2607 = vpop.f32.mrb[0].mxu0
  %2608 = vmatprep.mubr.f32.mxu0 %v783
  %2609 = vmatmul.mubr.f32.gmra.mrb[0].mxu0 %v782
  %v2610 = vpop.f32.mrb[0].mxu0
  %v2611 = vadd.f32 %v2376, %v2610
  %v2612 = vpop.f32.mrb[0].mxu0
  %2613 = vmatprep.mubr.f32.mxu0 %v796
  %2614 = vmatmul.mubr.f32.gmra.mrb[0].mxu0 %v795
  %v2615 = vpop.f32.mrb[0].mxu0
  %v2616 = vadd.f32 %v2381, %v2615
  %v2617 = vpop.f32.mrb[0].mxu0
  %2618 = vmatprep.mubr.f32.mxu0 %v809
  %2619 = vmatmul.mubr.f32.gmra.mrb[0].mxu0 %v808
  %v2620 = vpop.f32.mrb[0].mxu0
  %v2621 = vadd.f32 %v2386, %v2620
  %v2622 = vpop.f32.mrb[0].mxu0
  %2623 = vmatprep.mubr.f32.mxu0 %v822
  %2624 = vmatmul.mubr.f32.gmra.mrb[0].mxu0 %v821
  %v2625 = vpop.f32.mrb[0].mxu0
  %v2626 = vadd.f32 %v2391, %v2625
  %v2627 = vpop.f32.mrb[0].mxu0
  %2628 = vmatprep.mubr.f32.mxu0 %v835
  %2629 = vmatmul.mubr.f32.gmra.mrb[0].mxu0 %v834
  %v2630 = vpop.f32.mrb[0].mxu0
  %v2631 = vadd.f32 %v2396, %v2630
  %v2632 = vpop.f32.mrb[0].mxu0
  %2633 = vmatprep.mubr.f32.mxu0 %v848
  %2634 = vmatmul.mubr.f32.gmra.mrb[0].mxu0 %v847
  %v2635 = vpop.f32.mrb[0].mxu0
  %v2636 = vadd.f32 %v2401, %v2635
  %v2637 = vpop.f32.mrb[0].mxu0
  %2638 = vmatprep.mubr.f32.mxu0 %v861
  %2639 = vmatmul.mubr.f32.gmra.mrb[0].mxu0 %v860
  %v2640 = vpop.f32.mrb[0].mxu0
  %v2641 = vadd.f32 %v2406, %v2640
  %v2642 = vpop.f32.mrb[0].mxu0
  %2643 = vmatprep.mubr.f32.mxu0 %v874
  %2644 = vmatmul.mubr.f32.gmra.mrb[0].mxu0 %v873
  %v2645 = vpop.f32.mrb[0].mxu0
  %v2646 = vadd.f32 %v2411, %v2645
  %v2647 = vpop.f32.mrb[0].mxu0
  %2648 = vmatprep.mubr.f32.mxu0 %v887
  %2649 = vmatmul.mubr.f32.gmra.mrb[0].mxu0 %v886
  %v2650 = vpop.f32.mrb[0].mxu0
  %v2651 = vadd.f32 %v2416, %v2650
  %v2652 = vpop.f32.mrb[0].mxu0
  %2653 = vmatprep.mubr.f32.mxu0 %v900
  %2654 = vmatmul.mubr.f32.gmra.mrb[0].mxu0 %v899
  %v2655 = vpop.f32.mrb[0].mxu0
  %v2656 = vadd.f32 %v2421, %v2655
  %v2657 = vpop.f32.mrb[0].mxu0
  %2658 = vmatprep.mubr.f32.mxu0 %v913
  %2659 = vmatmul.mubr.f32.gmra.mrb[0].mxu0 %v912
  %v2660 = vpop.f32.mrb[0].mxu0
  %v2661 = vadd.f32 %v2426, %v2660
  %v2662 = vpop.f32.mrb[0].mxu0
  %2663 = vmatprep.mubr.f32.mxu0 %v926
  %2664 = vmatmul.mubr.f32.gmra.mrb[0].mxu0 %v925
  %v2665 = vpop.f32.mrb[0].mxu0
  %v2666 = vadd.f32 %v2431, %v2665
  %v2667 = vpop.f32.mrb[0].mxu0
  %2668 = vmatprep.mubr.f32.mxu0 %v939
  %2669 = vmatmul.mubr.f32.gmra.mrb[0].mxu0 %v938
  %v2670 = vpop.f32.mrb[0].mxu0
  %v2671 = vadd.f32 %v2436, %v2670
  %v2672 = vpop.f32.mrb[0].mxu0
  %2673 = vmatprep.mubr.f32.mxu0 %v952
  %2674 = vmatmul.mubr.f32.gmra.mrb[0].mxu0 %v951
  %v2675 = vpop.f32.mrb[0].mxu0
  %v2676 = vadd.f32 %v2441, %v2675
  %v2677 = vpop.f32.mrb[0].mxu0
  %2678 = vmatprep.mubr.f32.mxu0 %v965
  %2679 = vmatmul.mubr.f32.gmra.mrb[0].mxu0 %v964
  %v2680 = vpop.f32.mrb[0].mxu0
  %v2681 = vadd.f32 %v2446, %v2680
  %v2682 = vpop.f32.mrb[0].mxu0
  %2683 = vdwg.mxu0
  %2684 = vmatprep.subr.mxu0 0.0
  %2685 = vmatpush1.msra.mxu0 %v1159
  %2686 = vmatprep.subr.mxu0 0.0
  %2687 = vmatpush1.msra.mxu0 %v1160
  %2688 = vmatprep.subr.mxu0 0.0
  %2689 = vmatpush1.msra.mxu0 %v1161
  %2690 = vmatprep.subr.mxu0 0.0
  %2691 = vmatpush1.msra.mxu0 %v1162
  %2692 = vmatprep.subr.mxu0 0.0
  %2693 = vmatpush1.msra.mxu0 %v1163
  %2694 = vmatprep.subr.mxu0 0.0
  %2695 = vmatpush1.msra.mxu0 %v1164
  %2696 = vmatprep.subr.mxu0 0.0
  %2697 = vmatpush1.msra.mxu0 %v1165
  %2698 = vmatprep.subr.mxu0 0.0
  %2699 = vmatpush1.msra.mxu0 %v1166
  %2700 = vmatprep.subr.mxu0 0.0
  %2701 = vmatpush1.msra.mxu0 %v1167
  %2702 = vmatprep.subr.mxu0 0.0
  %2703 = vmatpush1.msra.mxu0 %v1168
  %2704 = vmatprep.subr.mxu0 0.0
  %2705 = vmatpush1.msra.mxu0 %v1169
  %2706 = vmatprep.subr.mxu0 0.0
  %2707 = vmatpush1.msra.mxu0 %v1170
  %2708 = vmatprep.subr.mxu0 0.0
  %2709 = vmatpush1.msra.mxu0 0.0
  %2710 = vmatprep.subr.mxu0 0.0
  %2711 = vmatpush1.msra.mxu0 0.0
  %2712 = vmatprep.subr.mxu0 0.0
  %2713 = vmatpush1.msra.mxu0 0.0
  %2714 = vmatprep.subr.mxu0 0.0
  %2715 = vmatpush1.msra.mxu0 0.0
  %2716 = vmatprep.subr.mxu0 0.0
  %2717 = vmatpush1.msra.mxu0 0.0
  %2718 = vmatprep.subr.mxu0 0.0
  %2719 = vmatpush1.msra.mxu0 0.0
  %2720 = vmatprep.subr.mxu0 0.0
  %2721 = vmatpush1.msra.mxu0 0.0
  %2722 = vmatprep.subr.mxu0 0.0
  %2723 = vmatpush1.msra.mxu0 0.0
  %2724 = vmatprep.subr.mxu0 0.0
  %2725 = vmatpush1.msra.mxu0 0.0
  %2726 = vmatprep.subr.mxu0 0.0
  %2727 = vmatpush1.msra.mxu0 0.0
  %2728 = vmatprep.subr.mxu0 0.0
  %2729 = vmatpush1.msra.mxu0 0.0
  %2730 = vmatprep.subr.mxu0 0.0
  %2731 = vmatpush1.msra.mxu0 0.0
  %2732 = vmatprep.subr.mxu0 0.0
  %2733 = vmatpush1.msra.mxu0 0.0
  %2734 = vmatprep.subr.mxu0 0.0
  %2735 = vmatpush1.msra.mxu0 0.0
  %2736 = vmatprep.subr.mxu0 0.0
  %2737 = vmatpush1.msra.mxu0 0.0
  %2738 = vmatprep.subr.mxu0 0.0
  %2739 = vmatpush1.msra.mxu0 0.0
  %2740 = vmatprep.subr.mxu0 0.0
  %2741 = vmatpush1.msra.mxu0 0.0
  %2742 = vmatprep.subr.mxu0 0.0
  %2743 = vmatpush1.msra.mxu0 0.0
  %2744 = vmatprep.subr.mxu0 0.0
  %2745 = vmatpush1.msra.mxu0 0.0
  %2746 = vmatprep.subr.mxu0 0.0
  %2747 = vmatpush1.msra.mxu0 0.0
  %2748 = vmatprep.mubr.f32.mxu0 0.0
  %2749 = vmatmul.mubr.f32.gmra.mrb[0].mxu0 %v1173
  %v2750 = vpop.f32.mrb[0].mxu0
  %v2751 = vadd.f32 %v2516, %v2750
  %v2752 = vpop.f32.mrb[0].mxu0
  %2753 = vmatprep.mubr.f32.mxu0 0.0
  %2754 = vmatmul.mubr.f32.gmra.mrb[0].mxu0 %v1176
  %v2755 = vpop.f32.mrb[0].mxu0
  %v2756 = vadd.f32 %v2521, %v2755
  %v2757 = vpop.f32.mrb[0].mxu0
  %2758 = vmatprep.mubr.f32.mxu0 0.0
  %2759 = vmatmul.mubr.f32.gmra.mrb[0].mxu0 %v1179
  %v2760 = vpop.f32.mrb[0].mxu0
  %v2761 = vadd.f32 %v2526, %v2760
  %v2762 = vpop.f32.mrb[0].mxu0
  %2763 = vmatprep.mubr.f32.mxu0 0.0
  %2764 = vmatmul.mubr.f32.gmra.mrb[0].mxu0 %v1182
  %v2765 = vpop.f32.mrb[0].mxu0
  %v2766 = vadd.f32 %v2531, %v2765
  %v2767 = vpop.f32.mrb[0].mxu0
  %2768 = vmatprep.mubr.f32.mxu0 0.0
  %2769 = vmatmul.mubr.f32.gmra.mrb[0].mxu0 %v1185
  %v2770 = vpop.f32.mrb[0].mxu0
  %v2771 = vadd.f32 %v2536, %v2770
  %v2772 = vpop.f32.mrb[0].mxu0
  %2773 = vmatprep.mubr.f32.mxu0 0.0
  %2774 = vmatmul.mubr.f32.gmra.mrb[0].mxu0 %v1188
  %v2775 = vpop.f32.mrb[0].mxu0
  %v2776 = vadd.f32 %v2541, %v2775
  %v2777 = vpop.f32.mrb[0].mxu0
  %2778 = vmatprep.mubr.f32.mxu0 0.0
  %2779 = vmatmul.mubr.f32.gmra.mrb[0].mxu0 %v1191
  %v2780 = vpop.f32.mrb[0].mxu0
  %v2781 = vadd.f32 %v2546, %v2780
  %v2782 = vpop.f32.mrb[0].mxu0
  %2783 = vmatprep.mubr.f32.mxu0 0.0
  %2784 = vmatmul.mubr.f32.gmra.mrb[0].mxu0 %v1194
  %v2785 = vpop.f32.mrb[0].mxu0
  %v2786 = vadd.f32 %v2551, %v2785
  %v2787 = vpop.f32.mrb[0].mxu0
  %2788 = vmatprep.mubr.f32.mxu0 0.0
  %2789 = vmatmul.mubr.f32.gmra.mrb[0].mxu0 %v1197
  %v2790 = vpop.f32.mrb[0].mxu0
  %v2791 = vadd.f32 %v2556, %v2790
  %v2792 = vpop.f32.mrb[0].mxu0
  %2793 = vmatprep.mubr.f32.mxu0 0.0
  %2794 = vmatmul.mubr.f32.gmra.mrb[0].mxu0 %v1200
  %v2795 = vpop.f32.mrb[0].mxu0
  %v2796 = vadd.f32 %v2561, %v2795
  %v2797 = vpop.f32.mrb[0].mxu0
  %2798 = vmatprep.mubr.f32.mxu0 0.0
  %2799 = vmatmul.mubr.f32.gmra.mrb[0].mxu0 %v1203
  %v2800 = vpop.f32.mrb[0].mxu0
  %v2801 = vadd.f32 %v2566, %v2800
  %v2802 = vpop.f32.mrb[0].mxu0
  %2803 = vmatprep.mubr.f32.mxu0 0.0
  %2804 = vmatmul.mubr.f32.gmra.mrb[0].mxu0 %v1206
  %v2805 = vpop.f32.mrb[0].mxu0
  %v2806 = vadd.f32 %v2571, %v2805
  %v2807 = vpop.f32.mrb[0].mxu0
  %2808 = vmatprep.mubr.f32.mxu0 0.0
  %2809 = vmatmul.mubr.f32.gmra.mrb[0].mxu0 %v1209
  %v2810 = vpop.f32.mrb[0].mxu0
  %v2811 = vadd.f32 %v2576, %v2810
  %v2812 = vpop.f32.mrb[0].mxu0
  %2813 = vmatprep.mubr.f32.mxu0 0.0
  %2814 = vmatmul.mubr.f32.gmra.mrb[0].mxu0 %v1212
  %v2815 = vpop.f32.mrb[0].mxu0
  %v2816 = vadd.f32 %v2581, %v2815
  %v2817 = vpop.f32.mrb[0].mxu0
  %2818 = vmatprep.mubr.f32.mxu0 0.0
  %2819 = vmatmul.mubr.f32.gmra.mrb[0].mxu0 %v1215
  %v2820 = vpop.f32.mrb[0].mxu0
  %v2821 = vadd.f32 %v2586, %v2820
  %v2822 = vpop.f32.mrb[0].mxu0
  %2823 = vmatprep.mubr.f32.mxu0 0.0
  %2824 = vmatmul.mubr.f32.gmra.mrb[0].mxu0 %v1218
  %v2825 = vpop.f32.mrb[0].mxu0
  %v2826 = vadd.f32 %v2591, %v2825
  %v2827 = vpop.f32.mrb[0].mxu0
  %2828 = vmatprep.mubr.f32.mxu0 0.0
  %2829 = vmatmul.mubr.f32.gmra.mrb[0].mxu0 %v1221
  %v2830 = vpop.f32.mrb[0].mxu0
  %v2831 = vadd.f32 %v2596, %v2830
  %v2832 = vpop.f32.mrb[0].mxu0
  %2833 = vmatprep.mubr.f32.mxu0 0.0
  %2834 = vmatmul.mubr.f32.gmra.mrb[0].mxu0 %v1224
  %v2835 = vpop.f32.mrb[0].mxu0
  %v2836 = vadd.f32 %v2601, %v2835
  %v2837 = vpop.f32.mrb[0].mxu0
  %2838 = vmatprep.mubr.f32.mxu0 0.0
  %2839 = vmatmul.mubr.f32.gmra.mrb[0].mxu0 %v1227
  %v2840 = vpop.f32.mrb[0].mxu0
  %v2841 = vadd.f32 %v2606, %v2840
  %v2842 = vpop.f32.mrb[0].mxu0
  %2843 = vmatprep.mubr.f32.mxu0 0.0
  %2844 = vmatmul.mubr.f32.gmra.mrb[0].mxu0 %v1230
  %v2845 = vpop.f32.mrb[0].mxu0
  %v2846 = vadd.f32 %v2611, %v2845
  %v2847 = vpop.f32.mrb[0].mxu0
  %2848 = vmatprep.mubr.f32.mxu0 0.0
  %2849 = vmatmul.mubr.f32.gmra.mrb[0].mxu0 %v1233
  %v2850 = vpop.f32.mrb[0].mxu0
  %v2851 = vadd.f32 %v2616, %v2850
  %v2852 = vpop.f32.mrb[0].mxu0
  %2853 = vmatprep.mubr.f32.mxu0 0.0
  %2854 = vmatmul.mubr.f32.gmra.mrb[0].mxu0 %v1236
  %v2855 = vpop.f32.mrb[0].mxu0
  %v2856 = vadd.f32 %v2621, %v2855
  %v2857 = vpop.f32.mrb[0].mxu0
  %2858 = vmatprep.mubr.f32.mxu0 0.0
  %2859 = vmatmul.mubr.f32.gmra.mrb[0].mxu0 %v1239
  %v2860 = vpop.f32.mrb[0].mxu0
  %v2861 = vadd.f32 %v2626, %v2860
  %v2862 = vpop.f32.mrb[0].mxu0
  %2863 = vmatprep.mubr.f32.mxu0 0.0
  %2864 = vmatmul.mubr.f32.gmra.mrb[0].mxu0 %v1242
  %v2865 = vpop.f32.mrb[0].mxu0
  %v2866 = vadd.f32 %v2631, %v2865
  %v2867 = vpop.f32.mrb[0].mxu0
  %2868 = vmatprep.mubr.f32.mxu0 0.0
  %2869 = vmatmul.mubr.f32.gmra.mrb[0].mxu0 %v1245
  %v2870 = vpop.f32.mrb[0].mxu0
  %v2871 = vadd.f32 %v2636, %v2870
  %v2872 = vpop.f32.mrb[0].mxu0
  %2873 = vmatprep.mubr.f32.mxu0 0.0
  %2874 = vmatmul.mubr.f32.gmra.mrb[0].mxu0 %v1248
  %v2875 = vpop.f32.mrb[0].mxu0
  %v2876 = vadd.f32 %v2641, %v2875
  %v2877 = vpop.f32.mrb[0].mxu0
  %2878 = vmatprep.mubr.f32.mxu0 0.0
  %2879 = vmatmul.mubr.f32.gmra.mrb[0].mxu0 %v1251
  %v2880 = vpop.f32.mrb[0].mxu0
  %v2881 = vadd.f32 %v2646, %v2880
  %v2882 = vpop.f32.mrb[0].mxu0
  %2883 = vmatprep.mubr.f32.mxu0 0.0
  %2884 = vmatmul.mubr.f32.gmra.mrb[0].mxu0 %v1254
  %v2885 = vpop.f32.mrb[0].mxu0
  %v2886 = vadd.f32 %v2651, %v2885
  %v2887 = vpop.f32.mrb[0].mxu0
  %2888 = vmatprep.mubr.f32.mxu0 0.0
  %2889 = vmatmul.mubr.f32.gmra.mrb[0].mxu0 %v1257
  %v2890 = vpop.f32.mrb[0].mxu0
  %v2891 = vadd.f32 %v2656, %v2890
  %v2892 = vpop.f32.mrb[0].mxu0
  %2893 = vmatprep.mubr.f32.mxu0 0.0
  %2894 = vmatmul.mubr.f32.gmra.mrb[0].mxu0 %v1260
  %v2895 = vpop.f32.mrb[0].mxu0
  %v2896 = vadd.f32 %v2661, %v2895
  %v2897 = vpop.f32.mrb[0].mxu0
  %2898 = vmatprep.mubr.f32.mxu0 0.0
  %2899 = vmatmul.mubr.f32.gmra.mrb[0].mxu0 %v1263
  %v2900 = vpop.f32.mrb[0].mxu0
  %v2901 = vadd.f32 %v2666, %v2900
  %v2902 = vpop.f32.mrb[0].mxu0
  %2903 = vmatprep.mubr.f32.mxu0 0.0
  %2904 = vmatmul.mubr.f32.gmra.mrb[0].mxu0 %v1266
  %v2905 = vpop.f32.mrb[0].mxu0
  %v2906 = vadd.f32 %v2671, %v2905
  %v2907 = vpop.f32.mrb[0].mxu0
  %2908 = vmatprep.mubr.f32.mxu0 0.0
  %2909 = vmatmul.mubr.f32.gmra.mrb[0].mxu0 %v1269
  %v2910 = vpop.f32.mrb[0].mxu0
  %v2911 = vadd.f32 %v2676, %v2910
  %v2912 = vpop.f32.mrb[0].mxu0
  %2913 = vmatprep.mubr.f32.mxu0 0.0
  %2914 = vmatmul.mubr.f32.gmra.mrb[0].mxu0 %v1272
  %v2915 = vpop.f32.mrb[0].mxu0
  %v2916 = vadd.f32 %v2681, %v2915
  %v2917 = vpop.f32.mrb[0].mxu0
  %2918 = vdwg.mxu0
  %vm2919 = vcmask 400384
  %2920 = vst.msk [vmem:[%s3] sm:$0xff] %vm2919, %v2751
  %2921 = vst.msk [vmem:[%s3 + $0x8] sm:$0xff] %vm2919, %v2756
  %2922 = vst.msk [vmem:[%s3 + $0x10] sm:$0xff] %vm2919, %v2761
  %2923 = vst.msk [vmem:[%s3 + $0x18] sm:$0xff] %vm2919, %v2766
  %2924 = vst.msk [vmem:[%s3 + $0x20] sm:$0xff] %vm2919, %v2771
  %2925 = vst.msk [vmem:[%s3 + $0x28] sm:$0xff] %vm2919, %v2776
  %2926 = vst.msk [vmem:[%s3 + $0x30] sm:$0xff] %vm2919, %v2781
  %2927 = vst.msk [vmem:[%s3 + $0x38] sm:$0xff] %vm2919, %v2786
  %2928 = vst.msk [vmem:[%s3 + $0x40] sm:$0xff] %vm2919, %v2791
  %2929 = vst.msk [vmem:[%s3 + $0x48] sm:$0xff] %vm2919, %v2796
  %2930 = vst.msk [vmem:[%s3 + $0x50] sm:$0xff] %vm2919, %v2801
  %2931 = vst.msk [vmem:[%s3 + $0x58] sm:$0xff] %vm2919, %v2806
  %2932 = vst.msk [vmem:[%s3 + $0x60] sm:$0xff] %vm2919, %v2811
  %2933 = vst.msk [vmem:[%s3 + $0x68] sm:$0xff] %vm2919, %v2816
  %2934 = vst.msk [vmem:[%s3 + $0x70] sm:$0xff] %vm2919, %v2821
  %2935 = vst.msk [vmem:[%s3 + $0x78] sm:$0xff] %vm2919, %v2826
  %2936 = vst.msk [vmem:[%s3 + $0x80] sm:$0xff] %vm2919, %v2831
  %2937 = vst.msk [vmem:[%s3 + $0x88] sm:$0xff] %vm2919, %v2836
  %2938 = vst.msk [vmem:[%s3 + $0x90] sm:$0xff] %vm2919, %v2841
  %2939 = vst.msk [vmem:[%s3 + $0x98] sm:$0xff] %vm2919, %v2846
  %2940 = vst.msk [vmem:[%s3 + $0xa0] sm:$0xff] %vm2919, %v2851
  %2941 = vst.msk [vmem:[%s3 + $0xa8] sm:$0xff] %vm2919, %v2856
  %2942 = vst.msk [vmem:[%s3 + $0xb0] sm:$0xff] %vm2919, %v2861
  %2943 = vst.msk [vmem:[%s3 + $0xb8] sm:$0xff] %vm2919, %v2866
  %2944 = vst.msk [vmem:[%s3 + $0xc0] sm:$0xff] %vm2919, %v2871
  %2945 = vst.msk [vmem:[%s3 + $0xc8] sm:$0xff] %vm2919, %v2876
  %2946 = vst.msk [vmem:[%s3 + $0xd0] sm:$0xff] %vm2919, %v2881
  %2947 = vst.msk [vmem:[%s3 + $0xd8] sm:$0xff] %vm2919, %v2886
  %2948 = vst.msk [vmem:[%s3 + $0xe0] sm:$0xff] %vm2919, %v2891
  %2949 = vst.msk [vmem:[%s3 + $0xe8] sm:$0xff] %vm2919, %v2896
  %2950 = vst.msk [vmem:[%s3 + $0xf0] sm:$0xff] %vm2919, %v2901
  %2951 = vst.msk [vmem:[%s3 + $0xf8] sm:$0xff] %vm2919, %v2906
  %2952 = vst.msk [vmem:[%s3 + $0x100] sm:$0xff] %vm2919, %v2911
  %2953 = vst.msk [vmem:[%s3 + $0x108] sm:$0xff] %vm2919, %v2916
  // Predicated region
  $region14: #{mul_conv1x1.1} parent=0 // pred_check
    _
  $region15: #{mul_conv1x1.1} parent=0 // pred_check_branch
    %2955 = sbr.rel (0) target = $region17
  $region16: #{mul_conv1x1.1} parent=0 // pred_region
    _
  $region17: #{mul_conv1x1.1} parent=0 // pred_fallthru
    _
  // Predicated region
  $region18: #{mul_conv1x1.1} parent=0 // pred_check
    _
  $region19: #{mul_conv1x1.1} parent=0 // pred_check_branch
    %2957 = sbr.rel (0) target = $region21
  $region20: #{mul_conv1x1.1} parent=0 // pred_region
    _
  $region21: #{mul_conv1x1.1} parent=0 // pred_fallthru
    _

</llo_original>
